<compile_context>
chip_gen: v6e
topology: v6e:2x2x1
jax: 0.10.0
libtpu: 0.0.40
codegen_flags: <defaults>
</compile_context>

<pallas_src>
import functools
import math

import jax
import jax.numpy as jnp
from jax import lax
from jax.experimental import pallas as pl
from jax.experimental.pallas import tpu as pltpu


def _mhsa_kernel(x_ref, wqkv_ref, wout_ref, o_ref,
                 k_sc, v_sc, q_sc, m_sc, l_sc, acc_sc, y_sc, *, nb_heads):
    """One grid step = (batch element n, query tile qi).

    x_ref    : (TQ, C)    bf16  current query tile of the input
    wqkv_ref : (C, 3C)    bf16  qkv weight, (in, out), 1/sqrt(D) folded into Q cols
    wout_ref : (C, C)     bf16  output-projection weight, (in, out)
    o_ref    : (TQ, C)          output tile
    k_sc/v_sc: (H, Lp, D) bf16  persistent per-core K/V caches (filled tile by tile)
    q_sc     : (H, TQ, D) bf16  head-major Q for this tile
    m_sc/l_sc: (H, TQ, 1) f32   online-softmax running max / denominator
    acc_sc   : (H, TQ, D) f32   online-softmax output accumulator
    y_sc     : (TQ, C)    bf16  merged (head-concatenated) attention output
    """
    TQ, C = x_ref.shape
    H = nb_heads
    D = C // H
    cdt = jnp.bfloat16                      # MXU operand dtype; accumulation is f32

    qi = pl.program_id(1)
    q_start = pl.multiple_of(qi * TQ, TQ)

    # ---- fused QKV projection for this tile (each tile projected exactly once) ----
    qkv = jnp.dot(x_ref[...], wqkv_ref[...],
                  preferred_element_type=jnp.float32)            # (TQ, 3C) f32

    # Head split via direct slab stores (no stack/concat temporaries).
    for h in range(H):
        q_sc[h] = qkv[:, h * D:(h + 1) * D].astype(cdt)
        k_sc[h, pl.ds(q_start, TQ), :] = \
            qkv[:, C + h * D:C + (h + 1) * D].astype(cdt)
        v_sc[h, pl.ds(q_start, TQ), :] = \
            qkv[:, 2 * C + h * D:2 * C + (h + 1) * D].astype(cdt)

    # ---- flash (online-softmax) attention over causal KV tiles ----
    # m/l kept in VMEM scratch (canonical Mosaic flash pattern); acc is too large
    # for vregs either way.
    m_sc[...] = jnp.full(m_sc.shape, -jnp.inf, dtype=m_sc.dtype)
    l_sc[...] = jnp.zeros(l_sc.shape, dtype=l_sc.dtype)
    acc_sc[...] = jnp.zeros(acc_sc.shape, dtype=acc_sc.dtype)

    def kv_tile(kv, mask):
        kv_start = pl.multiple_of(kv * TQ, TQ)
        k_t = k_sc[:, pl.ds(kv_start, TQ), :]                    # (H, TK, D) bf16
        v_t = v_sc[:, pl.ds(kv_start, TQ), :]
        s = jnp.einsum('hqd,hkd->hqk', q_sc[...], k_t,
                       preferred_element_type=jnp.float32)       # (H, TQ, TK) f32
        if mask is not None:                                     # diagonal tile only
            s = jnp.where(mask[None, :, :], s, -jnp.inf)
        m_prev = m_sc[...]
        m_new = jnp.maximum(m_prev, s.max(axis=-1, keepdims=True))
        alpha = jnp.exp(m_prev - m_new)
        # TODO(synk): on v6e/v7x the exp could run in bf16 (EUP ~2x); kept f32 so
        # the same kernel stays valid on v5e (no bf16 EUP).
        p = jnp.exp(s - m_new)
        l_sc[...] = alpha * l_sc[...] + p.sum(axis=-1, keepdims=True)
        acc_sc[...] = alpha * acc_sc[...] + jnp.einsum(
            'hqk,hkd->hqd', p.astype(cdt), v_t,
            preferred_element_type=jnp.float32)
        m_sc[...] = m_new

    # Bulk tiles strictly below the diagonal: no causal-mask work at all.
    def bulk_step(kv, carry):
        kv_tile(kv, None)
        return carry

    lax.fori_loop(0, qi, bulk_step, 0)

    # Diagonal tile: within-tile causal mask (built once per grid step, never
    # inside the kv loop; it does not depend on qi).
    row = lax.broadcasted_iota(jnp.int32, (TQ, TQ), 0)
    col = lax.broadcasted_iota(jnp.int32, (TQ, TQ), 1)
    kv_tile(qi, col <= row)

    # ---- finalize: softmax denom, head merge (slab stores), output projection ----
    inv_l = pl.reciprocal(l_sc[...], approx=True)                # (H, TQ, 1)
    for h in range(H):
        y_sc[:, h * D:(h + 1) * D] = (acc_sc[h] * inv_l[h]).astype(cdt)
    out = jnp.dot(y_sc[...], wout_ref[...], preferred_element_type=jnp.float32)
    o_ref[...] = out.astype(o_ref.dtype)


def _vmem_limit_bytes():
    # Generation-aware VMEM budget: ~85% of the core's capacity
    # (~108 MiB on v5e/v6e's 128 MiB, ~54 MiB on v7x's 64 MiB).
    cap = 128 * 1024 * 1024
    try:
        cap = int(getattr(pltpu.get_tpu_info(), "vmem_capacity_bytes", cap))
    except Exception:
        pass
    return int(cap * 0.85)


def mh_causal_self_attention(x, w_qkv, w_out, nb_heads, *, block_q=256):
    """x: (N, L, C). w_qkv: (3C, C[,1]), w_out: (C, C[,1]) -- PyTorch Conv1d
    (kernel_size=1, bias=False) weights.  Returns (N, L, C) in x.dtype.

    Note: on v5e, block_q=128 matches its 4x128^2 MXU better (pass block_q=128).
    """
    if w_qkv.ndim == 3:
        w_qkv = w_qkv[..., 0]
    if w_out.ndim == 3:
        w_out = w_out[..., 0]

    N, L, C = x.shape
    assert C % nb_heads == 0, "embed_dim must be divisible by nb_heads"
    assert w_qkv.shape == (3 * C, C) and w_out.shape == (C, C)
    D = C // nb_heads
    out_dtype = x.dtype

    # Sublane-aligned query tile; pad L instead of falling back to a single
    # full-length tile (keeps the flash tiling + causal tile skipping intact).
    block_q = max(8, min(block_q, L))
    block_q = ((block_q + 7) // 8) * 8
    Lp = ((L + block_q - 1) // block_q) * block_q
    num_q = Lp // block_q

    # bf16 operands prepared once on the XLA side.
    xb = x.astype(jnp.bfloat16)
    if Lp != L:
        # Zero tail-padding is inert: causality keeps every real query row from
        # attending padded key rows, and padded output rows are sliced off below.
        xb = jnp.pad(xb, ((0, 0), (0, Lp - L), (0, 0)))

    scale = 1.0 / math.sqrt(D)
    w_qkv_f32 = w_qkv.astype(jnp.float32)
    w_qkv_scaled = jnp.concatenate([w_qkv_f32[:C] * scale, w_qkv_f32[C:]], axis=0)
    w_qkv_t = w_qkv_scaled.T.astype(jnp.bfloat16)               # (C_in, 3C), Q scaled
    w_out_t = w_out.astype(jnp.float32).T.astype(jnp.bfloat16)  # (C_in, C_out)

    kernel = functools.partial(_mhsa_kernel, nb_heads=nb_heads)

    cost = pl.CostEstimate(
        flops=int(N * (8 * Lp * C * C + 2 * Lp * Lp * C)),
        transcendentals=int(N * nb_heads * Lp * Lp // 2),
        bytes_accessed=int(N * Lp * C * (2 + jnp.dtype(out_dtype).itemsize)
                           + 8 * C * C),
    )

    out = pl.pallas_call(
        kernel,
        out_shape=jax.ShapeDtypeStruct((N, Lp, C), out_dtype),
        grid_spec=pltpu.PrefetchScalarGridSpec(
            num_scalar_prefetch=0,
            grid=(N, num_q),
            in_specs=[
                # Only the current (block_q, C) tile of x is ever VMEM-resident.
                pl.BlockSpec((None, block_q, C), lambda n, qi: (n, qi, 0)),
                # Weights: constant block index -> fetched once and reused.
                # (pipeline_mode=pl.Buffered(1) would halve their VMEM buffers;
                # left at the default for portability.)
                pl.BlockSpec((C, 3 * C), lambda n, qi: (0, 0)),
                pl.BlockSpec((C, C), lambda n, qi: (0, 0)),
            ],
            out_specs=pl.BlockSpec((None, block_q, C), lambda n, qi: (n, qi, 0)),
            scratch_shapes=[
                pltpu.VMEM((nb_heads, Lp, D), jnp.bfloat16),        # K cache
                pltpu.VMEM((nb_heads, Lp, D), jnp.bfloat16),        # V cache
                pltpu.VMEM((nb_heads, block_q, D), jnp.bfloat16),   # Q (head-major)
                pltpu.VMEM((nb_heads, block_q, 1), jnp.float32),    # running max
                pltpu.VMEM((nb_heads, block_q, 1), jnp.float32),    # running denom
                pltpu.VMEM((nb_heads, block_q, D), jnp.float32),    # output accum
                pltpu.VMEM((block_q, C), jnp.bfloat16),             # merged heads
            ],
        ),
        compiler_params=pltpu.CompilerParams(
            # K/V caches build up across query tiles => qi axis must stay serial;
            # the batch axis is megacore-parallel.
            # TODO(synk): on v7x (2 TCs) an extra parallel head-group axis would
            # keep both cores busy when N == 1.
            dimension_semantics=("parallel", "arbitrary"),
            vmem_limit_bytes=_vmem_limit_bytes(),
        ),
        cost_estimate=cost,
    )(xb, w_qkv_t, w_out_t)

    return out[:, :L, :] if Lp != L else out


def _reference(x, w_qkv, w_out, nb_heads):
    """Pure-JAX (f32) mirror of the PyTorch forward pass, for verification."""
    N, L, C = x.shape
    D = C // nb_heads
    qkv = jnp.einsum('nlc,oc->nlo', x, w_qkv).reshape(N, L, 3, nb_heads, D)
    Q = qkv[:, :, 0].transpose(0, 2, 1, 3)   # (N, H, L, D)
    K = qkv[:, :, 1].transpose(0, 2, 1, 3)
    V = qkv[:, :, 2].transpose(0, 2, 1, 3)
    score = jnp.einsum('nhld,nhsd->nhls', Q, K)
    mask = jnp.tril(jnp.ones((L, L), dtype=bool))
    score = jnp.where(mask, score, -jnp.inf) / math.sqrt(D)
    A = jax.nn.softmax(score, axis=-1)
    Y = jnp.einsum('nhls,nhsd->nhld', A, V)
    Yc = Y.transpose(0, 2, 1, 3).reshape(N, L, C)
    return jnp.einsum('nlc,oc->nlo', Yc, w_out)


if __name__ == "__main__":
    N, L, C, H = 2, 16, 32, 4                # batch, seq, embed_dim, nb_heads
    key = jax.random.PRNGKey(0)
    kx, kq, ko = jax.random.split(key, 3)

    x = jax.random.normal(kx, (N, L, C), dtype=jnp.float32)
    # PyTorch Conv1d(k=1, bias=False) weights with the kernel dim squeezed.
    w_qkv = jax.random.normal(kq, (3 * C, C), dtype=jnp.float32) * 0.05
    w_out = jax.random.normal(ko, (C, C), dtype=jnp.float32) * 0.05

    y_ref = _reference(x, w_qkv, w_out, H)

    # Single query tile (block_q clamps to L).
    y = jax.block_until_ready(mh_causal_self_attention(x, w_qkv, w_out, H))
    assert y.shape == (N, L, C)
    assert jnp.allclose(y, y_ref, atol=2e-2, rtol=2e-2), \
        f"max abs err {float(jnp.max(jnp.abs(y - y_ref)))}"

    # Multi-tile path: exercises the incremental K/V cache, the unmasked bulk
    # loop + masked diagonal tile, and the causal tile skipping.
    y2 = jax.block_until_ready(
        mh_causal_self_attention(x, w_qkv, w_out, H, block_q=8))
    assert jnp.allclose(y2, y_ref, atol=2e-2, rtol=2e-2), \
        f"max abs err (tiled) {float(jnp.max(jnp.abs(y2 - y_ref)))}"

    # Non-divisible L: exercises the zero-padding path.
    L3 = 12
    x3 = x[:, :L3]
    y3_ref = _reference(x3, w_qkv, w_out, H)
    y3 = jax.block_until_ready(
        mh_causal_self_attention(x3, w_qkv, w_out, H, block_q=8))
    assert y3.shape == (N, L3, C)
    assert jnp.allclose(y3, y3_ref, atol=2e-2, rtol=2e-2), \
        f"max abs err (padded) {float(jnp.max(jnp.abs(y3 - y3_ref)))}"

    print("KERNEL_OK")
</pallas_src>

<mosaic_0001>
module attributes {stable_mosaic.version = 11 : i64} {
  func.func @_mhsa_kernel(%arg0: i32, %arg1: i32, %arg2: memref<1x16x32xbf16, #tpu.memory_space<vmem>>, %arg3: memref<32x96xbf16, #tpu.memory_space<vmem>>, %arg4: memref<32x32xbf16, #tpu.memory_space<vmem>>, %arg5: memref<1x16x32xf32, #tpu.memory_space<vmem>>, %arg6: memref<4x16x8xbf16, #tpu.memory_space<vmem>>, %arg7: memref<4x16x8xbf16, #tpu.memory_space<vmem>>, %arg8: memref<4x16x8xbf16, #tpu.memory_space<vmem>>, %arg9: memref<4x16x1xf32, #tpu.memory_space<vmem>>, %arg10: memref<4x16x1xf32, #tpu.memory_space<vmem>>, %arg11: memref<4x16x8xf32, #tpu.memory_space<vmem>>, %arg12: memref<16x32xbf16, #tpu.memory_space<vmem>>) attributes {dimension_semantics = [#tpu.dimension_semantics<parallel>, #tpu.dimension_semantics<arbitrary>], iteration_bounds = array<i64: 2, 1>, scalar_prefetch = 0 : i64, scratch_operands = 7 : i64, tpu.core_type = #tpu.core_type<tc>, window_params = [{transform_indices = @transform_0, window_bounds = array<i64: 1, 16, 32>}, {pipeline_mode = #tpu.pipeline_mode<synchronous>, transform_indices = @transform_1, window_bounds = array<i64: 32, 96>}, {pipeline_mode = #tpu.pipeline_mode<synchronous>, transform_indices = @transform_2, window_bounds = array<i64: 32, 32>}, {transform_indices = @transform_3, window_bounds = array<i64: 1, 16, 32>}]} {
    %c16_i32 = arith.constant 16 : i32
    %0 = arith.muli %arg1, %c16_i32 : i32
    %1 = tpu.assume_multiple %0, 16 : i32
    %c0 = arith.constant 0 : index
    %c0_0 = arith.constant 0 : index
    %c0_1 = arith.constant 0 : index
    %2 = vector.load %arg2[%c0, %c0_0, %c0_1] : memref<1x16x32xbf16, #tpu.memory_space<vmem>>, vector<1x16x32xbf16>
    %3 = vector.shape_cast %2 : vector<1x16x32xbf16> to vector<16x32xbf16>
    %c0_2 = arith.constant 0 : index
    %c0_3 = arith.constant 0 : index
    %4 = vector.load %arg3[%c0_2, %c0_3] : memref<32x96xbf16, #tpu.memory_space<vmem>>, vector<32x96xbf16>
    %cst = arith.constant dense<0.000000e+00> : vector<16x96xf32>
    %5 = tpu.matmul %3, %4, %cst {dimension_numbers = #tpu.dot_dimension_numbers<[1], [0], [0], [1], [0, 0, 1, 1], [], []>} : vector<16x32xbf16>, vector<32x96xbf16>, vector<16x96xf32> -> vector<16x96xf32>
    %6 = vector.extract_strided_slice %5 {offsets = [0, 0], sizes = [16, 8], strides = [1, 1]} : vector<16x96xf32> to vector<16x8xf32>
    %7 = arith.truncf %6 : vector<16x8xf32> to vector<16x8xbf16>
    %c0_4 = arith.constant 0 : index
    %c0_5 = arith.constant 0 : index
    %c0_6 = arith.constant 0 : index
    %8 = vector.load %arg8[%c0_4, %c0_5, %c0_6] : memref<4x16x8xbf16, #tpu.memory_space<vmem>>, vector<1x16x8xbf16>
    %9 = vector.shape_cast %8 : vector<1x16x8xbf16> to vector<16x8xbf16>
    %10 = vector.shape_cast %7 : vector<16x8xbf16> to vector<1x16x8xbf16>
    tpu.vector_store %arg8[%c0_4, %c0_5, %c0_6], %10 {strides = array<i32>} : memref<4x16x8xbf16, #tpu.memory_space<vmem>>, vector<1x16x8xbf16>,
    %11 = vector.extract_strided_slice %5 {offsets = [0, 32], sizes = [16, 8], strides = [1, 1]} : vector<16x96xf32> to vector<16x8xf32>
    %12 = arith.truncf %11 : vector<16x8xf32> to vector<16x8xbf16>
    %c0_7 = arith.constant 0 : index
    %13 = arith.index_cast %1 : i32 to index
    %c0_8 = arith.constant 0 : index
    %14 = vector.load %arg6[%c0_7, %13, %c0_8] : memref<4x16x8xbf16, #tpu.memory_space<vmem>>, vector<1x16x8xbf16>
    %15 = vector.shape_cast %14 : vector<1x16x8xbf16> to vector<16x8xbf16>
    %16 = vector.shape_cast %12 : vector<16x8xbf16> to vector<1x16x8xbf16>
    tpu.vector_store %arg6[%c0_7, %13, %c0_8], %16 {strides = array<i32>} : memref<4x16x8xbf16, #tpu.memory_space<vmem>>, vector<1x16x8xbf16>,
    %17 = vector.extract_strided_slice %5 {offsets = [0, 64], sizes = [16, 8], strides = [1, 1]} : vector<16x96xf32> to vector<16x8xf32>
    %18 = arith.truncf %17 : vector<16x8xf32> to vector<16x8xbf16>
    %c0_9 = arith.constant 0 : index
    %19 = arith.index_cast %1 : i32 to index
    %c0_10 = arith.constant 0 : index
    %20 = vector.load %arg7[%c0_9, %19, %c0_10] : memref<4x16x8xbf16, #tpu.memory_space<vmem>>, vector<1x16x8xbf16>
    %21 = vector.shape_cast %20 : vector<1x16x8xbf16> to vector<16x8xbf16>
    %22 = vector.shape_cast %18 : vector<16x8xbf16> to vector<1x16x8xbf16>
    tpu.vector_store %arg7[%c0_9, %19, %c0_10], %22 {strides = array<i32>} : memref<4x16x8xbf16, #tpu.memory_space<vmem>>, vector<1x16x8xbf16>,
    %23 = vector.extract_strided_slice %5 {offsets = [0, 8], sizes = [16, 8], strides = [1, 1]} : vector<16x96xf32> to vector<16x8xf32>
    %24 = arith.truncf %23 : vector<16x8xf32> to vector<16x8xbf16>
    %c1 = arith.constant 1 : index
    %c0_11 = arith.constant 0 : index
    %c0_12 = arith.constant 0 : index
    %25 = vector.load %arg8[%c1, %c0_11, %c0_12] : memref<4x16x8xbf16, #tpu.memory_space<vmem>>, vector<1x16x8xbf16>
    %26 = vector.shape_cast %25 : vector<1x16x8xbf16> to vector<16x8xbf16>
    %27 = vector.shape_cast %24 : vector<16x8xbf16> to vector<1x16x8xbf16>
    tpu.vector_store %arg8[%c1, %c0_11, %c0_12], %27 {strides = array<i32>} : memref<4x16x8xbf16, #tpu.memory_space<vmem>>, vector<1x16x8xbf16>,
    %28 = vector.extract_strided_slice %5 {offsets = [0, 40], sizes = [16, 8], strides = [1, 1]} : vector<16x96xf32> to vector<16x8xf32>
    %29 = arith.truncf %28 : vector<16x8xf32> to vector<16x8xbf16>
    %c1_13 = arith.constant 1 : index
    %30 = arith.index_cast %1 : i32 to index
    %c0_14 = arith.constant 0 : index
    %31 = vector.load %arg6[%c1_13, %30, %c0_14] : memref<4x16x8xbf16, #tpu.memory_space<vmem>>, vector<1x16x8xbf16>
    %32 = vector.shape_cast %31 : vector<1x16x8xbf16> to vector<16x8xbf16>
    %33 = vector.shape_cast %29 : vector<16x8xbf16> to vector<1x16x8xbf16>
    tpu.vector_store %arg6[%c1_13, %30, %c0_14], %33 {strides = array<i32>} : memref<4x16x8xbf16, #tpu.memory_space<vmem>>, vector<1x16x8xbf16>,
    %34 = vector.extract_strided_slice %5 {offsets = [0, 72], sizes = [16, 8], strides = [1, 1]} : vector<16x96xf32> to vector<16x8xf32>
    %35 = arith.truncf %34 : vector<16x8xf32> to vector<16x8xbf16>
    %c1_15 = arith.constant 1 : index
    %36 = arith.index_cast %1 : i32 to index
    %c0_16 = arith.constant 0 : index
    %37 = vector.load %arg7[%c1_15, %36, %c0_16] : memref<4x16x8xbf16, #tpu.memory_space<vmem>>, vector<1x16x8xbf16>
    %38 = vector.shape_cast %37 : vector<1x16x8xbf16> to vector<16x8xbf16>
    %39 = vector.shape_cast %35 : vector<16x8xbf16> to vector<1x16x8xbf16>
    tpu.vector_store %arg7[%c1_15, %36, %c0_16], %39 {strides = array<i32>} : memref<4x16x8xbf16, #tpu.memory_space<vmem>>, vector<1x16x8xbf16>,
    %40 = vector.extract_strided_slice %5 {offsets = [0, 16], sizes = [16, 8], strides = [1, 1]} : vector<16x96xf32> to vector<16x8xf32>
    %41 = arith.truncf %40 : vector<16x8xf32> to vector<16x8xbf16>
    %c2 = arith.constant 2 : index
    %c0_17 = arith.constant 0 : index
    %c0_18 = arith.constant 0 : index
    %42 = vector.load %arg8[%c2, %c0_17, %c0_18] : memref<4x16x8xbf16, #tpu.memory_space<vmem>>, vector<1x16x8xbf16>
    %43 = vector.shape_cast %42 : vector<1x16x8xbf16> to vector<16x8xbf16>
    %44 = vector.shape_cast %41 : vector<16x8xbf16> to vector<1x16x8xbf16>
    tpu.vector_store %arg8[%c2, %c0_17, %c0_18], %44 {strides = array<i32>} : memref<4x16x8xbf16, #tpu.memory_space<vmem>>, vector<1x16x8xbf16>,
    %45 = vector.extract_strided_slice %5 {offsets = [0, 48], sizes = [16, 8], strides = [1, 1]} : vector<16x96xf32> to vector<16x8xf32>
    %46 = arith.truncf %45 : vector<16x8xf32> to vector<16x8xbf16>
    %c2_19 = arith.constant 2 : index
    %47 = arith.index_cast %1 : i32 to index
    %c0_20 = arith.constant 0 : index
    %48 = vector.load %arg6[%c2_19, %47, %c0_20] : memref<4x16x8xbf16, #tpu.memory_space<vmem>>, vector<1x16x8xbf16>
    %49 = vector.shape_cast %48 : vector<1x16x8xbf16> to vector<16x8xbf16>
    %50 = vector.shape_cast %46 : vector<16x8xbf16> to vector<1x16x8xbf16>
    tpu.vector_store %arg6[%c2_19, %47, %c0_20], %50 {strides = array<i32>} : memref<4x16x8xbf16, #tpu.memory_space<vmem>>, vector<1x16x8xbf16>,
    %51 = vector.extract_strided_slice %5 {offsets = [0, 80], sizes = [16, 8], strides = [1, 1]} : vector<16x96xf32> to vector<16x8xf32>
    %52 = arith.truncf %51 : vector<16x8xf32> to vector<16x8xbf16>
    %c2_21 = arith.constant 2 : index
    %53 = arith.index_cast %1 : i32 to index
    %c0_22 = arith.constant 0 : index
    %54 = vector.load %arg7[%c2_21, %53, %c0_22] : memref<4x16x8xbf16, #tpu.memory_space<vmem>>, vector<1x16x8xbf16>
    %55 = vector.shape_cast %54 : vector<1x16x8xbf16> to vector<16x8xbf16>
    %56 = vector.shape_cast %52 : vector<16x8xbf16> to vector<1x16x8xbf16>
    tpu.vector_store %arg7[%c2_21, %53, %c0_22], %56 {strides = array<i32>} : memref<4x16x8xbf16, #tpu.memory_space<vmem>>, vector<1x16x8xbf16>,
    %57 = vector.extract_strided_slice %5 {offsets = [0, 24], sizes = [16, 8], strides = [1, 1]} : vector<16x96xf32> to vector<16x8xf32>
    %58 = arith.truncf %57 : vector<16x8xf32> to vector<16x8xbf16>
    %c3 = arith.constant 3 : index
    %c0_23 = arith.constant 0 : index
    %c0_24 = arith.constant 0 : index
    %59 = vector.load %arg8[%c3, %c0_23, %c0_24] : memref<4x16x8xbf16, #tpu.memory_space<vmem>>, vector<1x16x8xbf16>
    %60 = vector.shape_cast %59 : vector<1x16x8xbf16> to vector<16x8xbf16>
    %61 = vector.shape_cast %58 : vector<16x8xbf16> to vector<1x16x8xbf16>
    tpu.vector_store %arg8[%c3, %c0_23, %c0_24], %61 {strides = array<i32>} : memref<4x16x8xbf16, #tpu.memory_space<vmem>>, vector<1x16x8xbf16>,
    %62 = vector.extract_strided_slice %5 {offsets = [0, 56], sizes = [16, 8], strides = [1, 1]} : vector<16x96xf32> to vector<16x8xf32>
    %63 = arith.truncf %62 : vector<16x8xf32> to vector<16x8xbf16>
    %c3_25 = arith.constant 3 : index
    %64 = arith.index_cast %1 : i32 to index
    %c0_26 = arith.constant 0 : index
    %65 = vector.load %arg6[%c3_25, %64, %c0_26] : memref<4x16x8xbf16, #tpu.memory_space<vmem>>, vector<1x16x8xbf16>
    %66 = vector.shape_cast %65 : vector<1x16x8xbf16> to vector<16x8xbf16>
    %67 = vector.shape_cast %63 : vector<16x8xbf16> to vector<1x16x8xbf16>
    tpu.vector_store %arg6[%c3_25, %64, %c0_26], %67 {strides = array<i32>} : memref<4x16x8xbf16, #tpu.memory_space<vmem>>, vector<1x16x8xbf16>,
    %68 = vector.extract_strided_slice %5 {offsets = [0, 88], sizes = [16, 8], strides = [1, 1]} : vector<16x96xf32> to vector<16x8xf32>
    %69 = arith.truncf %68 : vector<16x8xf32> to vector<16x8xbf16>
    %c3_27 = arith.constant 3 : index
    %70 = arith.index_cast %1 : i32 to index
    %c0_28 = arith.constant 0 : index
    %71 = vector.load %arg7[%c3_27, %70, %c0_28] : memref<4x16x8xbf16, #tpu.memory_space<vmem>>, vector<1x16x8xbf16>
    %72 = vector.shape_cast %71 : vector<1x16x8xbf16> to vector<16x8xbf16>
    %73 = vector.shape_cast %69 : vector<16x8xbf16> to vector<1x16x8xbf16>
    tpu.vector_store %arg7[%c3_27, %70, %c0_28], %73 {strides = array<i32>} : memref<4x16x8xbf16, #tpu.memory_space<vmem>>, vector<1x16x8xbf16>,
    %cst_29 = arith.constant 0xFF800000 : f32
    %74 = vector.broadcast %cst_29 : f32 to vector<4x16x1xf32>
    %c0_30 = arith.constant 0 : index
    %c0_31 = arith.constant 0 : index
    %c0_32 = arith.constant 0 : index
    %75 = vector.load %arg9[%c0_30, %c0_31, %c0_32] : memref<4x16x1xf32, #tpu.memory_space<vmem>>, vector<4x16x1xf32>
    tpu.vector_store %arg9[%c0_30, %c0_31, %c0_32], %74 {strides = array<i32>} : memref<4x16x1xf32, #tpu.memory_space<vmem>>, vector<4x16x1xf32>,
    %cst_33 = arith.constant 0.000000e+00 : f32
    %76 = vector.broadcast %cst_33 : f32 to vector<4x16x1xf32>
    %c0_34 = arith.constant 0 : index
    %c0_35 = arith.constant 0 : index
    %c0_36 = arith.constant 0 : index
    %77 = vector.load %arg10[%c0_34, %c0_35, %c0_36] : memref<4x16x1xf32, #tpu.memory_space<vmem>>, vector<4x16x1xf32>
    tpu.vector_store %arg10[%c0_34, %c0_35, %c0_36], %76 {strides = array<i32>} : memref<4x16x1xf32, #tpu.memory_space<vmem>>, vector<4x16x1xf32>,
    %cst_37 = arith.constant 0.000000e+00 : f32
    %78 = vector.broadcast %cst_37 : f32 to vector<4x16x8xf32>
    %c0_38 = arith.constant 0 : index
    %c0_39 = arith.constant 0 : index
    %c0_40 = arith.constant 0 : index
    %79 = vector.load %arg11[%c0_38, %c0_39, %c0_40] : memref<4x16x8xf32, #tpu.memory_space<vmem>>, vector<4x16x8xf32>
    tpu.vector_store %arg11[%c0_38, %c0_39, %c0_40], %78 {strides = array<i32>} : memref<4x16x8xf32, #tpu.memory_space<vmem>>, vector<4x16x8xf32>,
    %c0_i32 = arith.constant 0 : i32
    %c0_i32_41 = arith.constant 0 : i32
    %80 = arith.subi %arg1, %c0_i32_41 : i32
    %81 = arith.addi %c0_i32_41, %80 : i32
    %c1_i32 = arith.constant 1 : i32
    scf.for %arg13 = %c0_i32_41 to %81 step %c1_i32  : i32 {
      %c16_i32_101 = arith.constant 16 : i32
      %161 = arith.muli %arg13, %c16_i32_101 : i32
      %162 = tpu.assume_multiple %161, 16 : i32
      %c0_102 = arith.constant 0 : index
      %163 = arith.index_cast %162 : i32 to index
      %c0_103 = arith.constant 0 : index
      %164 = vector.load %arg6[%c0_102, %163, %c0_103] : memref<4x16x8xbf16, #tpu.memory_space<vmem>>, vector<4x16x8xbf16>
      %c0_104 = arith.constant 0 : index
      %165 = arith.index_cast %162 : i32 to index
      %c0_105 = arith.constant 0 : index
      %166 = vector.load %arg7[%c0_104, %165, %c0_105] : memref<4x16x8xbf16, #tpu.memory_space<vmem>>, vector<4x16x8xbf16>
      %c0_106 = arith.constant 0 : index
      %c0_107 = arith.constant 0 : index
      %c0_108 = arith.constant 0 : index
      %167 = vector.load %arg8[%c0_106, %c0_107, %c0_108] : memref<4x16x8xbf16, #tpu.memory_space<vmem>>, vector<4x16x8xbf16>
      "tpu.trace_start"() <{level = 10 : i32, message = "hqd,hkd->hqk"}> : () -> ()
      %cst_109 = arith.constant dense<0.000000e+00> : vector<4x16x16xf32>
      %168 = tpu.matmul %167, %164, %cst_109 {dimension_numbers = #tpu.dot_dimension_numbers<[2], [2], [1], [1], [0, 0, 0, 1, 1, 1], [0], [0]>} : vector<4x16x8xbf16>, vector<4x16x8xbf16>, vector<4x16x16xf32> -> vector<4x16x16xf32>
      "tpu.trace_stop"() : () -> ()
      %c0_110 = arith.constant 0 : index
      %c0_111 = arith.constant 0 : index
      %c0_112 = arith.constant 0 : index
      %169 = vector.load %arg9[%c0_110, %c0_111, %c0_112] : memref<4x16x1xf32, #tpu.memory_space<vmem>>, vector<4x16x1xf32>
      %cst_113 = arith.constant dense<0xFF800000> : vector<4x16xf32>
      %170 = vector.multi_reduction <maximumf>, %168, %cst_113 [2] : vector<4x16x16xf32> to vector<4x16xf32>
      %171 = vector.shape_cast %170 : vector<4x16xf32> to vector<4x16x1xf32>
      %172 = arith.maximumf %169, %171 : vector<4x16x1xf32>
      %173 = arith.subf %169, %172 : vector<4x16x1xf32>
      %174 = math.exp %173 : vector<4x16x1xf32>
      %175 = vector.broadcast %172 : vector<4x16x1xf32> to vector<4x16x16xf32>
      %176 = arith.subf %168, %175 : vector<4x16x16xf32>
      %177 = math.exp %176 : vector<4x16x16xf32>
      %c0_114 = arith.constant 0 : index
      %c0_115 = arith.constant 0 : index
      %c0_116 = arith.constant 0 : index
      %178 = vector.load %arg10[%c0_114, %c0_115, %c0_116] : memref<4x16x1xf32, #tpu.memory_space<vmem>>, vector<4x16x1xf32>
      %179 = arith.mulf %174, %178 : vector<4x16x1xf32>
      %cst_117 = arith.constant dense<0.000000e+00> : vector<4x16xf32>
      %180 = vector.multi_reduction <add>, %177, %cst_117 [2] : vector<4x16x16xf32> to vector<4x16xf32>
      %181 = vector.shape_cast %180 : vector<4x16xf32> to vector<4x16x1xf32>
      %182 = arith.addf %179, %181 : vector<4x16x1xf32>
      %c0_118 = arith.constant 0 : index
      %c0_119 = arith.constant 0 : index
      %c0_120 = arith.constant 0 : index
      %183 = vector.load %arg10[%c0_118, %c0_119, %c0_120] : memref<4x16x1xf32, #tpu.memory_space<vmem>>, vector<4x16x1xf32>
      tpu.vector_store %arg10[%c0_118, %c0_119, %c0_120], %182 {strides = array<i32>} : memref<4x16x1xf32, #tpu.memory_space<vmem>>, vector<4x16x1xf32>,
      %c0_121 = arith.constant 0 : index
      %c0_122 = arith.constant 0 : index
      %c0_123 = arith.constant 0 : index
      %184 = vector.load %arg11[%c0_121, %c0_122, %c0_123] : memref<4x16x8xf32, #tpu.memory_space<vmem>>, vector<4x16x8xf32>
      %185 = vector.broadcast %174 : vector<4x16x1xf32> to vector<4x16x8xf32>
      %186 = arith.mulf %185, %184 : vector<4x16x8xf32>
      %187 = arith.truncf %177 : vector<4x16x16xf32> to vector<4x16x16xbf16>
      "tpu.trace_start"() <{level = 10 : i32, message = "hqk,hkd->hqd"}> : () -> ()
      %cst_124 = arith.constant dense<0.000000e+00> : vector<4x16x8xf32>
      %188 = tpu.matmul %187, %166, %cst_124 {dimension_numbers = #tpu.dot_dimension_numbers<[2], [1], [1], [2], [0, 0, 0, 1, 1, 2], [0], [0]>} : vector<4x16x16xbf16>, vector<4x16x8xbf16>, vector<4x16x8xf32> -> vector<4x16x8xf32>
      "tpu.trace_stop"() : () -> ()
      %189 = arith.addf %186, %188 : vector<4x16x8xf32>
      %c0_125 = arith.constant 0 : index
      %c0_126 = arith.constant 0 : index
      %c0_127 = arith.constant 0 : index
      %190 = vector.load %arg11[%c0_125, %c0_126, %c0_127] : memref<4x16x8xf32, #tpu.memory_space<vmem>>, vector<4x16x8xf32>
      tpu.vector_store %arg11[%c0_125, %c0_126, %c0_127], %189 {strides = array<i32>} : memref<4x16x8xf32, #tpu.memory_space<vmem>>, vector<4x16x8xf32>,
      %c0_128 = arith.constant 0 : index
      %c0_129 = arith.constant 0 : index
      %c0_130 = arith.constant 0 : index
      %191 = vector.load %arg9[%c0_128, %c0_129, %c0_130] : memref<4x16x1xf32, #tpu.memory_space<vmem>>, vector<4x16x1xf32>
      tpu.vector_store %arg9[%c0_128, %c0_129, %c0_130], %172 {strides = array<i32>} : memref<4x16x1xf32, #tpu.memory_space<vmem>>, vector<4x16x1xf32>,
    }
    %82 = tpu.iota {dimensions = array<i32: 0>} : vector<16x16xi32>
    %83 = tpu.iota {dimensions = array<i32: 1>} : vector<16x16xi32>
    %84 = arith.cmpi sle, %83, %82 : vector<16x16xi32>
    %c16_i32_42 = arith.constant 16 : i32
    %85 = arith.muli %arg1, %c16_i32_42 : i32
    %86 = tpu.assume_multiple %85, 16 : i32
    %c0_43 = arith.constant 0 : index
    %87 = arith.index_cast %86 : i32 to index
    %c0_44 = arith.constant 0 : index
    %88 = vector.load %arg6[%c0_43, %87, %c0_44] : memref<4x16x8xbf16, #tpu.memory_space<vmem>>, vector<4x16x8xbf16>
    %c0_45 = arith.constant 0 : index
    %89 = arith.index_cast %86 : i32 to index
    %c0_46 = arith.constant 0 : index
    %90 = vector.load %arg7[%c0_45, %89, %c0_46] : memref<4x16x8xbf16, #tpu.memory_space<vmem>>, vector<4x16x8xbf16>
    %c0_47 = arith.constant 0 : index
    %c0_48 = arith.constant 0 : index
    %c0_49 = arith.constant 0 : index
    %91 = vector.load %arg8[%c0_47, %c0_48, %c0_49] : memref<4x16x8xbf16, #tpu.memory_space<vmem>>, vector<4x16x8xbf16>
    "tpu.trace_start"() <{level = 10 : i32, message = "hqd,hkd->hqk"}> : () -> ()
    %cst_50 = arith.constant dense<0.000000e+00> : vector<4x16x16xf32>
    %92 = tpu.matmul %91, %88, %cst_50 {dimension_numbers = #tpu.dot_dimension_numbers<[2], [2], [1], [1], [0, 0, 0, 1, 1, 1], [0], [0]>} : vector<4x16x8xbf16>, vector<4x16x8xbf16>, vector<4x16x16xf32> -> vector<4x16x16xf32>
    "tpu.trace_stop"() : () -> ()
    %93 = vector.shape_cast %84 : vector<16x16xi1> to vector<1x16x16xi1>
    %cst_51 = arith.constant 0xFF800000 : f32
    %94 = vector.shape_cast %93 : vector<1x16x16xi1> to vector<1x16x16xi1>
    %95 = vector.broadcast %94 : vector<1x16x16xi1> to vector<4x16x16xi1>
    %96 = vector.broadcast %cst_51 : f32 to vector<4x16x16xf32>
    %97 = arith.select %95, %92, %96 : vector<4x16x16xi1>, vector<4x16x16xf32>
    %c0_52 = arith.constant 0 : index
    %c0_53 = arith.constant 0 : index
    %c0_54 = arith.constant 0 : index
    %98 = vector.load %arg9[%c0_52, %c0_53, %c0_54] : memref<4x16x1xf32, #tpu.memory_space<vmem>>, vector<4x16x1xf32>
    %cst_55 = arith.constant dense<0xFF800000> : vector<4x16xf32>
    %99 = vector.multi_reduction <maximumf>, %97, %cst_55 [2] : vector<4x16x16xf32> to vector<4x16xf32>
    %100 = vector.shape_cast %99 : vector<4x16xf32> to vector<4x16x1xf32>
    %101 = arith.maximumf %98, %100 : vector<4x16x1xf32>
    %102 = arith.subf %98, %101 : vector<4x16x1xf32>
    %103 = math.exp %102 : vector<4x16x1xf32>
    %104 = vector.broadcast %101 : vector<4x16x1xf32> to vector<4x16x16xf32>
    %105 = arith.subf %97, %104 : vector<4x16x16xf32>
    %106 = math.exp %105 : vector<4x16x16xf32>
    %c0_56 = arith.constant 0 : index
    %c0_57 = arith.constant 0 : index
    %c0_58 = arith.constant 0 : index
    %107 = vector.load %arg10[%c0_56, %c0_57, %c0_58] : memref<4x16x1xf32, #tpu.memory_space<vmem>>, vector<4x16x1xf32>
    %108 = arith.mulf %103, %107 : vector<4x16x1xf32>
    %cst_59 = arith.constant dense<0.000000e+00> : vector<4x16xf32>
    %109 = vector.multi_reduction <add>, %106, %cst_59 [2] : vector<4x16x16xf32> to vector<4x16xf32>
    %110 = vector.shape_cast %109 : vector<4x16xf32> to vector<4x16x1xf32>
    %111 = arith.addf %108, %110 : vector<4x16x1xf32>
    %c0_60 = arith.constant 0 : index
    %c0_61 = arith.constant 0 : index
    %c0_62 = arith.constant 0 : index
    %112 = vector.load %arg10[%c0_60, %c0_61, %c0_62] : memref<4x16x1xf32, #tpu.memory_space<vmem>>, vector<4x16x1xf32>
    tpu.vector_store %arg10[%c0_60, %c0_61, %c0_62], %111 {strides = array<i32>} : memref<4x16x1xf32, #tpu.memory_space<vmem>>, vector<4x16x1xf32>,
    %c0_63 = arith.constant 0 : index
    %c0_64 = arith.constant 0 : index
    %c0_65 = arith.constant 0 : index
    %113 = vector.load %arg11[%c0_63, %c0_64, %c0_65] : memref<4x16x8xf32, #tpu.memory_space<vmem>>, vector<4x16x8xf32>
    %114 = vector.broadcast %103 : vector<4x16x1xf32> to vector<4x16x8xf32>
    %115 = arith.mulf %114, %113 : vector<4x16x8xf32>
    %116 = arith.truncf %106 : vector<4x16x16xf32> to vector<4x16x16xbf16>
    "tpu.trace_start"() <{level = 10 : i32, message = "hqk,hkd->hqd"}> : () -> ()
    %cst_66 = arith.constant dense<0.000000e+00> : vector<4x16x8xf32>
    %117 = tpu.matmul %116, %90, %cst_66 {dimension_numbers = #tpu.dot_dimension_numbers<[2], [1], [1], [2], [0, 0, 0, 1, 1, 2], [0], [0]>} : vector<4x16x16xbf16>, vector<4x16x8xbf16>, vector<4x16x8xf32> -> vector<4x16x8xf32>
    "tpu.trace_stop"() : () -> ()
    %118 = arith.addf %115, %117 : vector<4x16x8xf32>
    %c0_67 = arith.constant 0 : index
    %c0_68 = arith.constant 0 : index
    %c0_69 = arith.constant 0 : index
    %119 = vector.load %arg11[%c0_67, %c0_68, %c0_69] : memref<4x16x8xf32, #tpu.memory_space<vmem>>, vector<4x16x8xf32>
    tpu.vector_store %arg11[%c0_67, %c0_68, %c0_69], %118 {strides = array<i32>} : memref<4x16x8xf32, #tpu.memory_space<vmem>>, vector<4x16x8xf32>,
    %c0_70 = arith.constant 0 : index
    %c0_71 = arith.constant 0 : index
    %c0_72 = arith.constant 0 : index
    %120 = vector.load %arg9[%c0_70, %c0_71, %c0_72] : memref<4x16x1xf32, #tpu.memory_space<vmem>>, vector<4x16x1xf32>
    tpu.vector_store %arg9[%c0_70, %c0_71, %c0_72], %101 {strides = array<i32>} : memref<4x16x1xf32, #tpu.memory_space<vmem>>, vector<4x16x1xf32>,
    %c0_73 = arith.constant 0 : index
    %c0_74 = arith.constant 0 : index
    %c0_75 = arith.constant 0 : index
    %121 = vector.load %arg10[%c0_73, %c0_74, %c0_75] : memref<4x16x1xf32, #tpu.memory_space<vmem>>, vector<4x16x1xf32>
    %122 = tpu.reciprocal %121 {approx = true} : vector<4x16x1xf32> -> vector<4x16x1xf32>
    %c0_76 = arith.constant 0 : index
    %c0_77 = arith.constant 0 : index
    %c0_78 = arith.constant 0 : index
    %123 = vector.load %arg11[%c0_76, %c0_77, %c0_78] : memref<4x16x8xf32, #tpu.memory_space<vmem>>, vector<1x16x8xf32>
    %124 = vector.shape_cast %123 : vector<1x16x8xf32> to vector<16x8xf32>
    %125 = vector.extract_strided_slice %122 {offsets = [0, 0, 0], sizes = [1, 16, 1], strides = [1, 1, 1]} : vector<4x16x1xf32> to vector<1x16x1xf32>
    %126 = vector.shape_cast %125 : vector<1x16x1xf32> to vector<16x1xf32>
    %127 = vector.broadcast %126 : vector<16x1xf32> to vector<16x8xf32>
    %128 = arith.mulf %124, %127 : vector<16x8xf32>
    %129 = arith.truncf %128 : vector<16x8xf32> to vector<16x8xbf16>
    %c0_79 = arith.constant 0 : index
    %c0_80 = arith.constant 0 : index
    %130 = vector.load %arg12[%c0_79, %c0_80] : memref<16x32xbf16, #tpu.memory_space<vmem>>, vector<16x8xbf16>
    tpu.vector_store %arg12[%c0_79, %c0_80], %129 {strides = array<i32>} : memref<16x32xbf16, #tpu.memory_space<vmem>>, vector<16x8xbf16>,
    %c1_81 = arith.constant 1 : index
    %c0_82 = arith.constant 0 : index
    %c0_83 = arith.constant 0 : index
    %131 = vector.load %arg11[%c1_81, %c0_82, %c0_83] : memref<4x16x8xf32, #tpu.memory_space<vmem>>, vector<1x16x8xf32>
    %132 = vector.shape_cast %131 : vector<1x16x8xf32> to vector<16x8xf32>
    %133 = vector.extract_strided_slice %122 {offsets = [1, 0, 0], sizes = [1, 16, 1], strides = [1, 1, 1]} : vector<4x16x1xf32> to vector<1x16x1xf32>
    %134 = vector.shape_cast %133 : vector<1x16x1xf32> to vector<16x1xf32>
    %135 = vector.broadcast %134 : vector<16x1xf32> to vector<16x8xf32>
    %136 = arith.mulf %132, %135 : vector<16x8xf32>
    %137 = arith.truncf %136 : vector<16x8xf32> to vector<16x8xbf16>
    %c0_84 = arith.constant 0 : index
    %c8 = arith.constant 8 : index
    %138 = vector.load %arg12[%c0_84, %c8] : memref<16x32xbf16, #tpu.memory_space<vmem>>, vector<16x8xbf16>
    tpu.vector_store %arg12[%c0_84, %c8], %137 {strides = array<i32>} : memref<16x32xbf16, #tpu.memory_space<vmem>>, vector<16x8xbf16>,
    %c2_85 = arith.constant 2 : index
    %c0_86 = arith.constant 0 : index
    %c0_87 = arith.constant 0 : index
    %139 = vector.load %arg11[%c2_85, %c0_86, %c0_87] : memref<4x16x8xf32, #tpu.memory_space<vmem>>, vector<1x16x8xf32>
    %140 = vector.shape_cast %139 : vector<1x16x8xf32> to vector<16x8xf32>
    %141 = vector.extract_strided_slice %122 {offsets = [2, 0, 0], sizes = [1, 16, 1], strides = [1, 1, 1]} : vector<4x16x1xf32> to vector<1x16x1xf32>
    %142 = vector.shape_cast %141 : vector<1x16x1xf32> to vector<16x1xf32>
    %143 = vector.broadcast %142 : vector<16x1xf32> to vector<16x8xf32>
    %144 = arith.mulf %140, %143 : vector<16x8xf32>
    %145 = arith.truncf %144 : vector<16x8xf32> to vector<16x8xbf16>
    %c0_88 = arith.constant 0 : index
    %c16 = arith.constant 16 : index
    %146 = vector.load %arg12[%c0_88, %c16] : memref<16x32xbf16, #tpu.memory_space<vmem>>, vector<16x8xbf16>
    tpu.vector_store %arg12[%c0_88, %c16], %145 {strides = array<i32>} : memref<16x32xbf16, #tpu.memory_space<vmem>>, vector<16x8xbf16>,
    %c3_89 = arith.constant 3 : index
    %c0_90 = arith.constant 0 : index
    %c0_91 = arith.constant 0 : index
    %147 = vector.load %arg11[%c3_89, %c0_90, %c0_91] : memref<4x16x8xf32, #tpu.memory_space<vmem>>, vector<1x16x8xf32>
    %148 = vector.shape_cast %147 : vector<1x16x8xf32> to vector<16x8xf32>
    %149 = vector.extract_strided_slice %122 {offsets = [3, 0, 0], sizes = [1, 16, 1], strides = [1, 1, 1]} : vector<4x16x1xf32> to vector<1x16x1xf32>
    %150 = vector.shape_cast %149 : vector<1x16x1xf32> to vector<16x1xf32>
    %151 = vector.broadcast %150 : vector<16x1xf32> to vector<16x8xf32>
    %152 = arith.mulf %148, %151 : vector<16x8xf32>
    %153 = arith.truncf %152 : vector<16x8xf32> to vector<16x8xbf16>
    %c0_92 = arith.constant 0 : index
    %c24 = arith.constant 24 : index
    %154 = vector.load %arg12[%c0_92, %c24] : memref<16x32xbf16, #tpu.memory_space<vmem>>, vector<16x8xbf16>
    tpu.vector_store %arg12[%c0_92, %c24], %153 {strides = array<i32>} : memref<16x32xbf16, #tpu.memory_space<vmem>>, vector<16x8xbf16>,
    %c0_93 = arith.constant 0 : index
    %c0_94 = arith.constant 0 : index
    %155 = vector.load %arg12[%c0_93, %c0_94] : memref<16x32xbf16, #tpu.memory_space<vmem>>, vector<16x32xbf16>
    %c0_95 = arith.constant 0 : index
    %c0_96 = arith.constant 0 : index
    %156 = vector.load %arg4[%c0_95, %c0_96] : memref<32x32xbf16, #tpu.memory_space<vmem>>, vector<32x32xbf16>
    %cst_97 = arith.constant dense<0.000000e+00> : vector<16x32xf32>
    %157 = tpu.matmul %155, %156, %cst_97 {dimension_numbers = #tpu.dot_dimension_numbers<[1], [0], [0], [1], [0, 0, 1, 1], [], []>} : vector<16x32xbf16>, vector<32x32xbf16>, vector<16x32xf32> -> vector<16x32xf32>
    %c0_98 = arith.constant 0 : index
    %c0_99 = arith.constant 0 : index
    %c0_100 = arith.constant 0 : index
    %158 = vector.load %arg5[%c0_98, %c0_99, %c0_100] : memref<1x16x32xf32, #tpu.memory_space<vmem>>, vector<1x16x32xf32>
    %159 = vector.shape_cast %158 : vector<1x16x32xf32> to vector<16x32xf32>
    %160 = vector.shape_cast %157 : vector<16x32xf32> to vector<1x16x32xf32>
    tpu.vector_store %arg5[%c0_98, %c0_99, %c0_100], %160 {strides = array<i32>} : memref<1x16x32xf32, #tpu.memory_space<vmem>>, vector<1x16x32xf32>,
    return
  }
  func.func @transform_0(%arg0: i32, %arg1: i32) -> (i32, i32, i32) {
    %c0_i32 = arith.constant 0 : i32
    %c0_i32_0 = arith.constant 0 : i32
    return %arg0, %arg1, %c0_i32 : i32, i32, i32
  }
  func.func @transform_1(%arg0: i32, %arg1: i32) -> (i32, i32) {
    %c0_i32 = arith.constant 0 : i32
    %c0_i32_0 = arith.constant 0 : i32
    %c0_i32_1 = arith.constant 0 : i32
    return %c0_i32, %c0_i32_0 : i32, i32
  }
  func.func @transform_2(%arg0: i32, %arg1: i32) -> (i32, i32) {
    %c0_i32 = arith.constant 0 : i32
    %c0_i32_0 = arith.constant 0 : i32
    %c0_i32_1 = arith.constant 0 : i32
    return %c0_i32, %c0_i32_0 : i32, i32
  }
  func.func @transform_3(%arg0: i32, %arg1: i32) -> (i32, i32, i32) {
    %c0_i32 = arith.constant 0 : i32
    %c0_i32_0 = arith.constant 0 : i32
    return %arg0, %arg1, %c0_i32 : i32, i32, i32
  }
}

</mosaic_0001>

<llo_original>
// kernel: tpu_custom_call.1
$region0: #{tpu_custom_call.1}
  #allocation0 [shape = 'u32[]', space=smem, size = 0x4, offset = 0x4, fixed_abs, tag = 'smem constant byte address 0x4 - core index']
  #allocation1 [shape = 'u32[144,128]{1,0:T(1,128)}', space=vmem, size = 0x12000, scoped, tag = 'internal scratch']
  #allocation2 [shape = 'bf16[4,16,8]{2,1,0:T(8,128)(2,1)}', space=vmem, size = 0x4000, scoped, tag = 'scratch operand']
  #allocation3 [shape = 'bf16[4,16,8]{2,1,0:T(8,128)(2,1)}', space=vmem, size = 0x4000, scoped, tag = 'scratch operand']
  #allocation4 [shape = 'bf16[4,16,8]{2,1,0:T(8,128)(2,1)}', space=vmem, size = 0x4000, scoped, tag = 'scratch operand']
  #allocation5 [shape = 'f32[4,16,1]{2,1,0:T(8,128)}', space=vmem, size = 0x8000, scoped, tag = 'scratch operand']
  #allocation6 [shape = 'f32[4,16,1]{2,1,0:T(8,128)}', space=vmem, size = 0x8000, scoped, tag = 'scratch operand']
  #allocation7 [shape = 'f32[4,16,8]{2,1,0:T(8,128)}', space=vmem, size = 0x8000, scoped, tag = 'scratch operand']
  #allocation8 [shape = 'bf16[16,32]{1,0:T(8,128)(2,1)}', space=vmem, size = 0x1000, scoped, tag = 'scratch operand']
  %s0 = inlined_call_operand.hbm [shape: bf16[2,16,32], index: 0, kind: input, shape index: {}]
  %s1 = inlined_call_operand.hbm [shape: bf16[32,96], index: 1, kind: input, shape index: {}]
  %s2 = inlined_call_operand.hbm [shape: bf16[32,32], index: 2, kind: input, shape index: {}]
  %s3 = inlined_call_operand.hbm [shape: f32[2,16,32], index: 3, kind: output, shape index: {}]
  %s4 = sld [smem:[#allocation0]]
  $region64: #{tpu_custom_call.1} parent=0
    _
  %s6 = ssub.s32 1, %s4
  %s7 = scalar_select 0, %s6, %s4
  $region1: #{tpu_custom_call.1} parent=0
    #allocation9 [shape = 'u8[8192]{0}', space=vmem, size = 0x2000, scoped, tag = 'input window, operand 0']
    #allocation10 [shape = 's32[2]{0}', space=sflag, size = 0x8, scoped, tag = 'scoped memory for tpu_custom_call.1']
    #allocation11 [shape = 's32[2]{0}', space=sflag, size = 0x8, scoped, tag = 'scoped memory for tpu_custom_call.1']
    #allocation12 [shape = 'u8[8192]{0}', space=vmem, size = 0x2000, scoped, tag = 'input window, operand 1, single buffered']
    #allocation13 [shape = 's32[1]{0}', space=sflag, size = 0x4, scoped, tag = 'scoped memory for tpu_custom_call.1']
    #allocation14 [shape = 'u8[8192]{0}', space=vmem, size = 0x2000, scoped, tag = 'input window, operand 2, single buffered']
    #allocation15 [shape = 'u8[16384]{0}', space=vmem, size = 0x4000, scoped, tag = 'output window, operand 0']
    %8 = vsyncpa [#allocation10], 0
    %s9 = scalar_lea.sflag [#allocation10], 1
    %10 = vsyncpa %s9, 0
    %11 = vsyncpa [#allocation13], 0
    %12 = vsyncpa [#allocation11], 0
    %s13 = scalar_lea.sflag [#allocation11], 1
    %14 = vsyncpa %s13, 0
    loop: start=0, step=1, limit=4
    $region2: #{tpu_custom_call.1} parent=1 // loop_pre_header
      _
    $region3: #{tpu_custom_call.1} parent=1 // loop_header
      %s16 = sphi 0, %s20
      %p17 = scmp.ge.s32.totalorder %s16, 4
      %s23 = sphi 0, %s35
      %s24 = sphi 0, %s31
      %s25 = sphi 0, %s23
      %s26 = sphi 0, %s24
      %s27 = sphi 0, %s25
      %s28 = sphi 0, %s26
      %s40 = sphi 0, %s42
      %s43 = sphi 0, %s40
      %s44 = sphi 0, %s43
      %s60 = sphi 0, %s44
      %s64 = sphi 0, %s64
      %s66 = sphi 0, %s64
      %s67 = sphi 0, %s66
      %s81 = sphi 0, %s67
      %s85 = sphi 0, %s85
      %s87 = sphi 0, %s85
      %s88 = sphi 0, %s87
      %s102 = sphi 0, %s88
      %s110 = sphi 0, %s112
      %s113 = sphi 0, %s110
      %s114 = sphi 0, %s113
      %s130 = sphi 0, %s114
    $region4: #{tpu_custom_call.1} parent=1 // loop_header_branch
      %19 = sbr.rel (%p17) target = $region8
    $region5: #{tpu_custom_call.1} parent=1 // loop_body
      %s21 = ssub.s32 %s16, 1
      %s22 = ssub.s32 %s16, 2
      %s29 = sadd.s32 1, %s24
      %p30 = scmp.ge.s32.totalorder %s29, 1
      %s31 = scalar_select %p30, 0, %s29
      %s32 = sadd.s32 1, %s23
      %s33 = scalar_select %p30, %s32, %s23
      %p34 = scmp.ge.s32.totalorder %s33, 2
      %s35 = scalar_select %p34, 0, %s33
      %s36 = ssub.s32 %s23, %s35
      %s37 = ssub.s32 %s24, %s31
      %s38 = sor.u32 %s36, %s37
      %p39 = scmp.eq.s32.totalorder %s38, 0
      %s41 = sadd.s32 %s40, 1
      %s42 = scalar_select %p39, %s40, %s41
      %p45 = pneg %p39
      %p46 = scmp.eq.s32.totalorder %s16, 1
      %p47 = por %p45, %p46
      %p48 = scmp.ne.s32.totalorder %s40, %s43
      %p49 = scmp.eq.s32.totalorder %s16, 0
      %p50 = por %p48, %p49
      %p51 = scmp.ne.s32.totalorder %s40, %s43
      %p52 = scmp.eq.s32.totalorder %s21, 1
      %p53 = por %p51, %p52
      %p54 = scmp.ne.s32.totalorder %s43, %s44
      %p55 = scmp.eq.s32.totalorder %s21, 0
      %p56 = por %p54, %p55
      %p57 = scmp.ne.s32.totalorder %s43, %s44
      %p58 = scmp.eq.s32.totalorder %s22, 1
      %p59 = por %p57, %p58
      %p61 = scmp.ne.s32.totalorder %s44, %s60
      %p62 = scmp.eq.s32.totalorder %s22, 0
      %p63 = por %p61, %p62
      %s65 = sadd.s32 %s64, 1
      %p68 = scmp.eq.s32.totalorder %s16, 1
      %p69 = scmp.ne.s32.totalorder %s64, %s66
      %p70 = scmp.eq.s32.totalorder %s16, 0
      %p71 = por %p69, %p70
      %p72 = scmp.ne.s32.totalorder %s64, %s66
      %p73 = scmp.eq.s32.totalorder %s21, 1
      %p74 = por %p72, %p73
      %p75 = scmp.ne.s32.totalorder %s66, %s67
      %p76 = scmp.eq.s32.totalorder %s21, 0
      %p77 = por %p75, %p76
      %p78 = scmp.ne.s32.totalorder %s66, %s67
      %p79 = scmp.eq.s32.totalorder %s22, 1
      %p80 = por %p78, %p79
      %p82 = scmp.ne.s32.totalorder %s67, %s81
      %p83 = scmp.eq.s32.totalorder %s22, 0
      %p84 = por %p82, %p83
      %s86 = sadd.s32 %s85, 1
      %p89 = scmp.eq.s32.totalorder %s16, 1
      %p90 = scmp.ne.s32.totalorder %s85, %s87
      %p91 = scmp.eq.s32.totalorder %s16, 0
      %p92 = por %p90, %p91
      %p93 = scmp.ne.s32.totalorder %s85, %s87
      %p94 = scmp.eq.s32.totalorder %s21, 1
      %p95 = por %p93, %p94
      %p96 = scmp.ne.s32.totalorder %s87, %s88
      %p97 = scmp.eq.s32.totalorder %s21, 0
      %p98 = por %p96, %p97
      %p99 = scmp.ne.s32.totalorder %s87, %s88
      %p100 = scmp.eq.s32.totalorder %s22, 1
      %p101 = por %p99, %p100
      %p103 = scmp.ne.s32.totalorder %s88, %s102
      %p104 = scmp.eq.s32.totalorder %s22, 0
      %p105 = por %p103, %p104
      %s106 = ssub.s32 %s23, %s35
      %s107 = ssub.s32 %s24, %s31
      %s108 = sor.u32 %s106, %s107
      %p109 = scmp.eq.s32.totalorder %s108, 0
      %s111 = sadd.s32 %s110, 1
      %s112 = scalar_select %p109, %s110, %s111
      %p115 = pneg %p109
      %p116 = scmp.eq.s32.totalorder %s16, 1
      %p117 = por %p115, %p116
      %p118 = scmp.ne.s32.totalorder %s110, %s113
      %p119 = scmp.eq.s32.totalorder %s16, 0
      %p120 = por %p118, %p119
      %p121 = scmp.ne.s32.totalorder %s110, %s113
      %p122 = scmp.eq.s32.totalorder %s21, 1
      %p123 = por %p121, %p122
      %p124 = scmp.ne.s32.totalorder %s113, %s114
      %p125 = scmp.eq.s32.totalorder %s21, 0
      %p126 = por %p124, %p125
      %p127 = scmp.ne.s32.totalorder %s113, %s114
      %p128 = scmp.eq.s32.totalorder %s22, 1
      %p129 = por %p127, %p128
      %p131 = scmp.ne.s32.totalorder %s114, %s130
      %p132 = scmp.eq.s32.totalorder %s22, 0
      %p133 = por %p131, %p132
      %p134 = scmp.le.s32.totalorder 1, %s16
      %p135 = scmp.lt.s32.totalorder %s16, 3
      %p136 = pnand %p134, %p135
      %p137 = pneg %p136
      // Predicated region
      $region9: #{tpu_custom_call.1} parent=5 // pred_check
        _
      $region10: #{tpu_custom_call.1} parent=5 // pred_check_branch
        %139 = sbr.rel (%p136) target = $region12
      $region11: #{tpu_custom_call.1} parent=5 // pred_region
        %s140 = ssub.s32 %s16, 1
        // Predicated region
        $region13: #{tpu_custom_call.1} parent=11 // pred_check
          %p141 = pneg %p77
        $region14: #{tpu_custom_call.1} parent=11 // pred_check_branch
          %143 = sbr.rel (%p141) target = $region16
        $region15: #{tpu_custom_call.1} parent=11 // pred_region
          %s145 = ssub.s32 256, 256
          %146 = vsyncadd [#allocation13], %s145
          %s147 = sshll.u32 [#allocation12], 4
          %s148 = int_to_ptr.vmem [resolvable:$true] %s147
          %153 = dma.hbm_to_vmem [thread:$0]  %s1, 256, %s148, [#allocation13], 64, 64, 4
        $region16: #{tpu_custom_call.1} parent=11 // pred_fallthru
          _
        // Predicated region
        $region17: #{tpu_custom_call.1} parent=11 // pred_check
          %p154 = pneg %p98
        $region18: #{tpu_custom_call.1} parent=11 // pred_check_branch
          %156 = sbr.rel (%p154) target = $region20
        $region19: #{tpu_custom_call.1} parent=11 // pred_region
          %s158 = ssub.s32 256, 256
          %159 = vsyncadd [#allocation13], %s158
          %s160 = sshll.u32 [#allocation14], 4
          %s161 = int_to_ptr.vmem [resolvable:$true] %s160
          %166 = dma.hbm_to_vmem [thread:$0]  %s2, 256, %s161, [#allocation13], 64, 64, 4
        $region20: #{tpu_custom_call.1} parent=11 // pred_fallthru
          _
      $region12: #{tpu_custom_call.1} parent=5 // pred_fallthru
        _
      %p167 = scmp.lt.s32.totalorder %s16, 2
      // Predicated region
      $region21: #{tpu_custom_call.1} parent=5 // pred_check
        %p168 = pneg %p167
      $region22: #{tpu_custom_call.1} parent=5 // pred_check_branch
        %170 = sbr.rel (%p168) target = $region24
      $region23: #{tpu_custom_call.1} parent=5 // pred_region
        // Predicated region
        $region25: #{tpu_custom_call.1} parent=23 // pred_check
          %p171 = pneg %p50
        $region26: #{tpu_custom_call.1} parent=23 // pred_check_branch
          %173 = sbr.rel (%p171) target = $region28
        $region27: #{tpu_custom_call.1} parent=23 // pred_region
          %s174 = sand.u32 %s40, 1
          %s175 = scalar_lea.sflag [#allocation10], %s174
          %s176 = sand.u32 %s40, 1
          %s177 = smul.addr %s176, 8
          %s178 = scalar_lea.vmem [#allocation9], %s177
          %s179 = smul.u32 2, %s24
          %s181 = ssub.s32 128, 128
          %182 = vsyncadd %s175, %s181
          %s183 = smul.addr %s23, 2
          %s184 = sadd.s32 %s179, %s183
          %s185 = smul.addr %s184, 64
          %s186 = scalar_lea.hbm %s0, %s185
          %s187 = sshll.u32 %s178, 4
          %s188 = int_to_ptr.vmem [resolvable:$true] %s187
          %193 = dma.hbm_to_vmem [thread:$0]  %s186, 128, %s188, %s175, 64, 64, 4
        $region28: #{tpu_custom_call.1} parent=23 // pred_fallthru
          _
      $region24: #{tpu_custom_call.1} parent=5 // pred_fallthru
        _
      %p194 = scmp.le.s32.totalorder 1, %s16
      %p195 = scmp.lt.s32.totalorder %s16, 3
      %p196 = pnand %p194, %p195
      %p197 = pneg %p196
      // Predicated region
      $region29: #{tpu_custom_call.1} parent=5 // pred_check
        _
      $region30: #{tpu_custom_call.1} parent=5 // pred_check_branch
        %199 = sbr.rel (%p196) target = $region32
      $region31: #{tpu_custom_call.1} parent=5 // pred_region
        %s200 = ssub.s32 %s16, 1
        %s201 = sand.u32 %s43, 1
        %s202 = scalar_lea.sflag [#allocation10], %s201
        %s203 = sand.u32 %s43, 1
        %s204 = smul.addr %s203, 8
        %s205 = scalar_lea.vmem [#allocation9], %s204
        // Predicated region
        $region33: #{tpu_custom_call.1} parent=31 // pred_check
          %p206 = pneg %p56
        $region34: #{tpu_custom_call.1} parent=31 // pred_check_branch
          %208 = sbr.rel (%p206) target = $region36
        $region35: #{tpu_custom_call.1} parent=31 // pred_region
          %209 = dma.done %s202, 128
        $region36: #{tpu_custom_call.1} parent=31 // pred_fallthru
          _
        // Predicated region
        $region37: #{tpu_custom_call.1} parent=31 // pred_check
          %p210 = pneg %p77
        $region38: #{tpu_custom_call.1} parent=31 // pred_check_branch
          %212 = sbr.rel (%p210) target = $region40
        $region39: #{tpu_custom_call.1} parent=31 // pred_region
          %213 = dma.done [#allocation13], 256
        $region40: #{tpu_custom_call.1} parent=31 // pred_fallthru
          _
        // Predicated region
        $region41: #{tpu_custom_call.1} parent=31 // pred_check
          %p214 = pneg %p98
        $region42: #{tpu_custom_call.1} parent=31 // pred_check_branch
          %216 = sbr.rel (%p214) target = $region44
        $region43: #{tpu_custom_call.1} parent=31 // pred_region
          %217 = dma.done [#allocation13], 256
        $region44: #{tpu_custom_call.1} parent=31 // pred_fallthru
          _
        %s218 = sand.u32 %s43, 1
        %s219 = scalar_lea.sflag [#allocation10], %s218
        %s220 = sand.u32 %s43, 1
        %s221 = smul.addr %s220, 8
        %s222 = scalar_lea.vmem [#allocation9], %s221
        %p223 = pneg %p56
        %p224 = pneg %p53
        %p225 = pneg %p77
        %p226 = pneg %p74
        %p227 = pneg %p98
        %p228 = pneg %p95
        %p229 = pneg %p126
        %p230 = pneg %p123
        %s231 = sand.u32 %s113, 1
        %s232 = scalar_lea.sflag [#allocation11], %s231
        %s233 = sand.u32 %s113, 1
        %s234 = smul.addr %s233, 16
        %s235 = scalar_lea.vmem [#allocation15], %s234
        %s236 = smul.u32 2, %s26
        %s237 = smul.u32 2, %s26
        %s239 = smul.u32 %s26, 16
        %v240 = vld [vmem:[%s205] sm:$0xf]
        %v241 = vld [vmem:[%s205 + $0x4] sm:$0xf]
        %v242 = vld [vmem:[#allocation12] sm:$0xf]
        %v243 = vld [vmem:[#allocation12 + $0x4] sm:$0xf]
        %v244 = vld [vmem:[#allocation12 + $0x8] sm:$0xf]
        %v245 = vld [vmem:[#allocation12 + $0xc] sm:$0xf]
        %v248 = vunpack.c.l.b16 %v240
        %v249 = vunpack.c.l.b16 %v241
        %v250 = vpack.c.b16 %v249, %v248
        %v255 = vunpack.c.l.b16 %v242
        %v256 = vunpack.c.l.b16 %v243
        %v257 = vunpack.c.l.b16 %v244
        %v258 = vunpack.c.l.b16 %v245
        %v259 = vpack.c.b16 %v256, %v255
        %v260 = vpack.c.b16 %v258, %v257
        %vm263 = vcmask 261120
        %v265 = vsel %vm263, %v250, 0
        %267 = vmatprep.subr.bf16.mxu0 0
        %268 = vmatpush1.bf16.msra.mxu0 0
        %269 = vmatprep.subr.bf16.mxu0 0
        %270 = vmatpush1.bf16.msra.mxu0 0
        %271 = vmatprep.subr.bf16.mxu0 0
        %272 = vmatpush1.bf16.msra.mxu0 0
        %273 = vmatprep.subr.bf16.mxu0 0
        %274 = vmatpush1.bf16.msra.mxu0 0
        %275 = vmatprep.subr.bf16.mxu0 0
        %276 = vmatpush1.bf16.msra.mxu0 0
        %277 = vmatprep.subr.bf16.mxu0 0
        %278 = vmatpush1.bf16.msra.mxu0 0
        %279 = vmatprep.subr.bf16.mxu0 0
        %280 = vmatpush1.bf16.msra.mxu0 %v260
        %281 = vmatprep.subr.bf16.mxu0 0
        %282 = vmatpush1.bf16.msra.mxu0 %v259
        %283 = vmatprep.subr.bf16.mxu0 0
        %284 = vmatpush2.bf16.msra.mxu0 0
        %285 = vmatprep.subr.bf16.mxu0 0
        %286 = vmatpush2.bf16.msra.mxu0 0
        %287 = vmatprep.subr.bf16.mxu0 0
        %288 = vmatpush2.bf16.msra.mxu0 0
        %289 = vmatprep.subr.bf16.mxu0 0
        %290 = vmatpush2.bf16.msra.mxu0 0
        %291 = vmatprep.subr.bf16.mxu0 0
        %292 = vmatpush2.bf16.msra.mxu0 0
        %293 = vmatprep.subr.bf16.mxu0 0
        %294 = vmatpush2.bf16.msra.mxu0 0
        %295 = vmatprep.subr.bf16.mxu0 0
        %296 = vmatpush2.bf16.msra.mxu0 0
        %297 = vmatprep.subr.bf16.mxu0 0
        %298 = vmatpush2.bf16.msra.mxu0 0
        %299 = vmatprep.mubr.bf16.mxu0 0
        %300 = vmatmul.mubr.bf16.gmra.mxu0 %v265
        %v301 = vpop.f32.mrf.mxu0
        %v302 = vadd.f32 0.0, %v301
        %v303 = vpop.f32.mrf.mxu0
        %v304 = vpop.f32.mrf.mxu0
        %v305 = vadd.f32 0.0, %v304
        %v306 = vpop.f32.mrf.mxu0
        %307 = vdwg.mxu0
        %v308 = vpack.c.bf16 %v305, %v302
        %v310 = vunpack.c.l.b16 %v308
        %v311 = vunpack.c.h.b16 %v308
        %v312 = vpack.c.b16 %v310, %v310
        %v313 = vpack.c.b16 %v311, %v311
        %vm316 = vcmask 60416
        %317 = vst.msk [vmem:[#allocation4] sm:$0xf] %vm316, %v312
        %318 = vst.msk [vmem:[#allocation4 + $0x4] sm:$0xf] %vm316, %v313
        %319 = vrot.lane.b32.xlu0 %v312, 96
        %v320 = vpop.permute.xlu0 %319
        %321 = vrot.lane.b32.xlu0 %v313, 96
        %v322 = vpop.permute.xlu0 %321
        %s325 = sshra.s32 %s239, 3
        %s326 = sand.u32 %s239, 7
        %s327 = smul.addr %s325, 4
        %s328 = scalar_lea.vmem [#allocation2], %s327
        %329 = vst.msk [vmem:[%s328] sm:$0xf] %vm316, %v320
        %330 = vst.msk [vmem:[%s328 + $0x4] sm:$0xf] %vm316, %v322
        %331 = vrot.lane.b32.xlu0 %v312, 64
        %v332 = vpop.permute.xlu0 %331
        %333 = vrot.lane.b32.xlu0 %v313, 64
        %v334 = vpop.permute.xlu0 %333
        %s337 = smul.addr %s325, 4
        %s338 = scalar_lea.vmem [#allocation3], %s337
        %339 = vst.msk [vmem:[%s338] sm:$0xf] %vm316, %v332
        %340 = vst.msk [vmem:[%s338 + $0x4] sm:$0xf] %vm316, %v334
        %341 = vrot.lane.b32.xlu0 %v312, 120
        %v342 = vpop.permute.xlu0 %341
        %343 = vrot.lane.b32.xlu0 %v313, 120
        %v344 = vpop.permute.xlu0 %343
        %s347 = scalar_lea.vmem [#allocation4], 8
        %348 = vst.msk [vmem:[%s347] sm:$0xf] %vm316, %v342
        %349 = vst.msk [vmem:[%s347 + $0x4] sm:$0xf] %vm316, %v344
        %350 = vrot.lane.b32.xlu0 %v312, 88
        %v351 = vpop.permute.xlu0 %350
        %352 = vrot.lane.b32.xlu0 %v313, 88
        %v353 = vpop.permute.xlu0 %352
        %s356 = sadd.s32 %s325, 2
        %s357 = smul.addr %s356, 4
        %s358 = scalar_lea.vmem [#allocation2], %s357
        %359 = vst.msk [vmem:[%s358] sm:$0xf] %vm316, %v351
        %360 = vst.msk [vmem:[%s358 + $0x4] sm:$0xf] %vm316, %v353
        %361 = vrot.lane.b32.xlu0 %v312, 56
        %v362 = vpop.permute.xlu0 %361
        %363 = vrot.lane.b32.xlu0 %v313, 56
        %v364 = vpop.permute.xlu0 %363
        %s367 = smul.addr %s356, 4
        %s368 = scalar_lea.vmem [#allocation3], %s367
        %369 = vst.msk [vmem:[%s368] sm:$0xf] %vm316, %v362
        %370 = vst.msk [vmem:[%s368 + $0x4] sm:$0xf] %vm316, %v364
        %371 = vrot.lane.b32.xlu0 %v312, 112
        %v372 = vpop.permute.xlu0 %371
        %373 = vrot.lane.b32.xlu0 %v313, 112
        %v374 = vpop.permute.xlu0 %373
        %s377 = scalar_lea.vmem [#allocation4], 16
        %378 = vst.msk [vmem:[%s377] sm:$0xf] %vm316, %v372
        %379 = vst.msk [vmem:[%s377 + $0x4] sm:$0xf] %vm316, %v374
        %380 = vrot.lane.b32.xlu0 %v312, 80
        %v381 = vpop.permute.xlu0 %380
        %382 = vrot.lane.b32.xlu0 %v313, 80
        %v383 = vpop.permute.xlu0 %382
        %s386 = sadd.s32 %s325, 4
        %s387 = smul.addr %s386, 4
        %s388 = scalar_lea.vmem [#allocation2], %s387
        %389 = vst.msk [vmem:[%s388] sm:$0xf] %vm316, %v381
        %390 = vst.msk [vmem:[%s388 + $0x4] sm:$0xf] %vm316, %v383
        %391 = vrot.lane.b32.xlu0 %v312, 48
        %v392 = vpop.permute.xlu0 %391
        %393 = vrot.lane.b32.xlu0 %v313, 48
        %v394 = vpop.permute.xlu0 %393
        %s397 = smul.addr %s386, 4
        %s398 = scalar_lea.vmem [#allocation3], %s397
        %399 = vst.msk [vmem:[%s398] sm:$0xf] %vm316, %v392
        %400 = vst.msk [vmem:[%s398 + $0x4] sm:$0xf] %vm316, %v394
        %401 = vrot.lane.b32.xlu0 %v312, 104
        %v402 = vpop.permute.xlu0 %401
        %403 = vrot.lane.b32.xlu0 %v313, 104
        %v404 = vpop.permute.xlu0 %403
        %s407 = scalar_lea.vmem [#allocation4], 24
        %408 = vst.msk [vmem:[%s407] sm:$0xf] %vm316, %v402
        %409 = vst.msk [vmem:[%s407 + $0x4] sm:$0xf] %vm316, %v404
        %410 = vrot.lane.b32.xlu0 %v312, 72
        %v411 = vpop.permute.xlu0 %410
        %412 = vrot.lane.b32.xlu0 %v313, 72
        %v413 = vpop.permute.xlu0 %412
        %s416 = sadd.s32 %s325, 6
        %s417 = smul.addr %s416, 4
        %s418 = scalar_lea.vmem [#allocation2], %s417
        %419 = vst.msk [vmem:[%s418] sm:$0xf] %vm316, %v411
        %420 = vst.msk [vmem:[%s418 + $0x4] sm:$0xf] %vm316, %v413
        %421 = vrot.lane.b32.xlu0 %v312, 40
        %v422 = vpop.permute.xlu0 %421
        %423 = vrot.lane.b32.xlu0 %v313, 40
        %v424 = vpop.permute.xlu0 %423
        %s427 = smul.addr %s416, 4
        %s428 = scalar_lea.vmem [#allocation3], %s427
        %429 = vst.msk [vmem:[%s428] sm:$0xf] %vm316, %v422
        %430 = vst.msk [vmem:[%s428 + $0x4] sm:$0xf] %vm316, %v424
        %vm431 = vcmask 7168
        %432 = vst.msk [vmem:[#allocation5] sm:$0xff] %vm431, -inf
        %433 = vst.msk [vmem:[#allocation5 + $0x8] sm:$0xff] %vm431, -inf
        %434 = vst.msk [vmem:[#allocation5 + $0x10] sm:$0xff] %vm431, -inf
        %435 = vst.msk [vmem:[#allocation5 + $0x18] sm:$0xff] %vm431, -inf
        %436 = vst.msk [vmem:[#allocation5 + $0x20] sm:$0xff] %vm431, -inf
        %437 = vst.msk [vmem:[#allocation5 + $0x28] sm:$0xff] %vm431, -inf
        %438 = vst.msk [vmem:[#allocation5 + $0x30] sm:$0xff] %vm431, -inf
        %439 = vst.msk [vmem:[#allocation5 + $0x38] sm:$0xff] %vm431, -inf
        %440 = vst.msk [vmem:[#allocation6] sm:$0xff] %vm431, 0.0
        %441 = vst.msk [vmem:[#allocation6 + $0x8] sm:$0xff] %vm431, 0.0
        %442 = vst.msk [vmem:[#allocation6 + $0x10] sm:$0xff] %vm431, 0.0
        %443 = vst.msk [vmem:[#allocation6 + $0x18] sm:$0xff] %vm431, 0.0
        %444 = vst.msk [vmem:[#allocation6 + $0x20] sm:$0xff] %vm431, 0.0
        %445 = vst.msk [vmem:[#allocation6 + $0x28] sm:$0xff] %vm431, 0.0
        %446 = vst.msk [vmem:[#allocation6 + $0x30] sm:$0xff] %vm431, 0.0
        %447 = vst.msk [vmem:[#allocation6 + $0x38] sm:$0xff] %vm431, 0.0
        %vm448 = vcmask 64512
        %449 = vst.msk [vmem:[#allocation7] sm:$0xff] %vm448, 0.0
        %450 = vst.msk [vmem:[#allocation7 + $0x8] sm:$0xff] %vm448, 0.0
        %451 = vst.msk [vmem:[#allocation7 + $0x10] sm:$0xff] %vm448, 0.0
        %452 = vst.msk [vmem:[#allocation7 + $0x18] sm:$0xff] %vm448, 0.0
        %453 = vst.msk [vmem:[#allocation7 + $0x20] sm:$0xff] %vm448, 0.0
        %454 = vst.msk [vmem:[#allocation7 + $0x28] sm:$0xff] %vm448, 0.0
        %455 = vst.msk [vmem:[#allocation7 + $0x30] sm:$0xff] %vm448, 0.0
        %456 = vst.msk [vmem:[#allocation7 + $0x38] sm:$0xff] %vm448, 0.0
        // While loop
        $region45: #{tpu_custom_call.1} parent=31 // loop_pre_header
          _
        $region46: #{tpu_custom_call.1} parent=31 // loop_header
          %s458 = sphi 0, %s460
          %p459 = scmp.ge.s32.totalorder %s458, %s26
        $region47: #{tpu_custom_call.1} parent=31 // loop_header_branch
          %462 = sbr.rel (%p459) target = $region51
        $region48: #{tpu_custom_call.1} parent=31 // loop_body
          %s463 = smul.u32 %s458, 16
          %s464 = sshra.s32 %s463, 3
          %s465 = sand.u32 %s463, 7
          %s466 = smul.addr %s464, 4
          %s467 = scalar_lea.vmem [#allocation2], %s466
          %v468 = vld [vmem:[%s467] sm:$0xf]
          %v469 = vld [vmem:[%s467 + $0x4] sm:$0xf]
          %v470 = vld [vmem:[%s467 + $0x8] sm:$0xf]
          %v471 = vld [vmem:[%s467 + $0xc] sm:$0xf]
          %v472 = vld [vmem:[%s467 + $0x10] sm:$0xf]
          %v473 = vld [vmem:[%s467 + $0x14] sm:$0xf]
          %v474 = vld [vmem:[%s467 + $0x18] sm:$0xf]
          %v475 = vld [vmem:[%s467 + $0x1c] sm:$0xf]
          %s476 = smul.addr %s464, 4
          %s477 = scalar_lea.vmem [#allocation3], %s476
          %v478 = vld [vmem:[%s477] sm:$0xf]
          %v479 = vld [vmem:[%s477 + $0x4] sm:$0xf]
          %v480 = vld [vmem:[%s477 + $0x8] sm:$0xf]
          %v481 = vld [vmem:[%s477 + $0xc] sm:$0xf]
          %v482 = vld [vmem:[%s477 + $0x10] sm:$0xf]
          %v483 = vld [vmem:[%s477 + $0x14] sm:$0xf]
          %v484 = vld [vmem:[%s477 + $0x18] sm:$0xf]
          %v485 = vld [vmem:[%s477 + $0x1c] sm:$0xf]
          %v486 = vld [vmem:[#allocation4] sm:$0xf]
          %v487 = vld [vmem:[#allocation4 + $0x4] sm:$0xf]
          %v488 = vld [vmem:[#allocation4 + $0x8] sm:$0xf]
          %v489 = vld [vmem:[#allocation4 + $0xc] sm:$0xf]
          %v490 = vld [vmem:[#allocation4 + $0x10] sm:$0xf]
          %v491 = vld [vmem:[#allocation4 + $0x14] sm:$0xf]
          %v492 = vld [vmem:[#allocation4 + $0x18] sm:$0xf]
          %v493 = vld [vmem:[#allocation4 + $0x1c] sm:$0xf]
          %v496 = vunpack.c.l.b16 %v486
          %v497 = vunpack.c.l.b16 %v487
          %v498 = vpack.c.b16 %v497, %v496
          %v501 = vunpack.c.l.b16 %v468
          %v502 = vunpack.c.l.b16 %v469
          %v503 = vpack.c.b16 %v502, %v501
          %v505 = vsel %vm448, %v498, 0
          %v508 = vsel %vm448, %v503, 0
          %510 = vmatprep.subr.bf16.mxu0 0
          %511 = vmatpush1.bf16.xpose.msra.mxu0 0
          %512 = vmatprep.subr.bf16.mxu0 0
          %513 = vmatpush1.bf16.xpose.msra.mxu0 0
          %514 = vmatprep.subr.bf16.mxu0 0
          %515 = vmatpush1.bf16.xpose.msra.mxu0 0
          %516 = vmatprep.subr.bf16.mxu0 0
          %517 = vmatpush1.bf16.xpose.msra.mxu0 0
          %518 = vmatprep.subr.bf16.mxu0 0
          %519 = vmatpush1.bf16.xpose.msra.mxu0 0
          %520 = vmatprep.subr.bf16.mxu0 0
          %521 = vmatpush1.bf16.xpose.msra.mxu0 0
          %522 = vmatprep.subr.bf16.mxu0 0
          %523 = vmatpush1.bf16.xpose.msra.mxu0 0
          %524 = vmatprep.subr.bf16.mxu0 0
          %525 = vmatpush1.bf16.xpose.msra.mxu0 %v508
          %526 = vmatprep.subr.bf16.mxu0 0
          %527 = vmatpush2.bf16.xpose.msra.mxu0 0
          %528 = vmatprep.subr.bf16.mxu0 0
          %529 = vmatpush2.bf16.xpose.msra.mxu0 0
          %530 = vmatprep.subr.bf16.mxu0 0
          %531 = vmatpush2.bf16.xpose.msra.mxu0 0
          %532 = vmatprep.subr.bf16.mxu0 0
          %533 = vmatpush2.bf16.xpose.msra.mxu0 0
          %534 = vmatprep.subr.bf16.mxu0 0
          %535 = vmatpush2.bf16.xpose.msra.mxu0 0
          %536 = vmatprep.subr.bf16.mxu0 0
          %537 = vmatpush2.bf16.xpose.msra.mxu0 0
          %538 = vmatprep.subr.bf16.mxu0 0
          %539 = vmatpush2.bf16.xpose.msra.mxu0 0
          %540 = vmatprep.subr.bf16.mxu0 0
          %541 = vmatpush2.bf16.xpose.msra.mxu0 0
          %542 = vmatprep.mubr.bf16.mxu0 0
          %543 = vmatmul.mubr.bf16.gmra.mxu0 %v505
          %v544 = vpop.f32.mrf.mxu0
          %v545 = vadd.f32 0.0, %v544
          %v546 = vpop.f32.mrf.mxu0
          %v547 = vpop.f32.mrf.mxu0
          %v548 = vadd.f32 0.0, %v547
          %v549 = vpop.f32.mrf.mxu0
          %550 = vdwg.mxu0
          %v553 = vunpack.c.l.b16 %v488
          %v554 = vunpack.c.l.b16 %v489
          %v555 = vpack.c.b16 %v554, %v553
          %v558 = vunpack.c.l.b16 %v470
          %v559 = vunpack.c.l.b16 %v471
          %v560 = vpack.c.b16 %v559, %v558
          %v562 = vsel %vm448, %v555, 0
          %v565 = vsel %vm448, %v560, 0
          %567 = vmatprep.subr.bf16.mxu0 0
          %568 = vmatpush1.bf16.xpose.msra.mxu0 0
          %569 = vmatprep.subr.bf16.mxu0 0
          %570 = vmatpush1.bf16.xpose.msra.mxu0 0
          %571 = vmatprep.subr.bf16.mxu0 0
          %572 = vmatpush1.bf16.xpose.msra.mxu0 0
          %573 = vmatprep.subr.bf16.mxu0 0
          %574 = vmatpush1.bf16.xpose.msra.mxu0 0
          %575 = vmatprep.subr.bf16.mxu0 0
          %576 = vmatpush1.bf16.xpose.msra.mxu0 0
          %577 = vmatprep.subr.bf16.mxu0 0
          %578 = vmatpush1.bf16.xpose.msra.mxu0 0
          %579 = vmatprep.subr.bf16.mxu0 0
          %580 = vmatpush1.bf16.xpose.msra.mxu0 0
          %581 = vmatprep.subr.bf16.mxu0 0
          %582 = vmatpush1.bf16.xpose.msra.mxu0 %v565
          %583 = vmatprep.subr.bf16.mxu0 0
          %584 = vmatpush2.bf16.xpose.msra.mxu0 0
          %585 = vmatprep.subr.bf16.mxu0 0
          %586 = vmatpush2.bf16.xpose.msra.mxu0 0
          %587 = vmatprep.subr.bf16.mxu0 0
          %588 = vmatpush2.bf16.xpose.msra.mxu0 0
          %589 = vmatprep.subr.bf16.mxu0 0
          %590 = vmatpush2.bf16.xpose.msra.mxu0 0
          %591 = vmatprep.subr.bf16.mxu0 0
          %592 = vmatpush2.bf16.xpose.msra.mxu0 0
          %593 = vmatprep.subr.bf16.mxu0 0
          %594 = vmatpush2.bf16.xpose.msra.mxu0 0
          %595 = vmatprep.subr.bf16.mxu0 0
          %596 = vmatpush2.bf16.xpose.msra.mxu0 0
          %597 = vmatprep.subr.bf16.mxu0 0
          %598 = vmatpush2.bf16.xpose.msra.mxu0 0
          %599 = vmatprep.mubr.bf16.mxu0 0
          %600 = vmatmul.mubr.bf16.gmra.mxu0 %v562
          %v601 = vpop.f32.mrf.mxu0
          %v602 = vadd.f32 0.0, %v601
          %v603 = vpop.f32.mrf.mxu0
          %v604 = vpop.f32.mrf.mxu0
          %v605 = vadd.f32 0.0, %v604
          %v606 = vpop.f32.mrf.mxu0
          %607 = vdwg.mxu0
          %v610 = vunpack.c.l.b16 %v490
          %v611 = vunpack.c.l.b16 %v491
          %v612 = vpack.c.b16 %v611, %v610
          %v615 = vunpack.c.l.b16 %v472
          %v616 = vunpack.c.l.b16 %v473
          %v617 = vpack.c.b16 %v616, %v615
          %v619 = vsel %vm448, %v612, 0
          %v622 = vsel %vm448, %v617, 0
          %624 = vmatprep.subr.bf16.mxu0 0
          %625 = vmatpush1.bf16.xpose.msra.mxu0 0
          %626 = vmatprep.subr.bf16.mxu0 0
          %627 = vmatpush1.bf16.xpose.msra.mxu0 0
          %628 = vmatprep.subr.bf16.mxu0 0
          %629 = vmatpush1.bf16.xpose.msra.mxu0 0
          %630 = vmatprep.subr.bf16.mxu0 0
          %631 = vmatpush1.bf16.xpose.msra.mxu0 0
          %632 = vmatprep.subr.bf16.mxu0 0
          %633 = vmatpush1.bf16.xpose.msra.mxu0 0
          %634 = vmatprep.subr.bf16.mxu0 0
          %635 = vmatpush1.bf16.xpose.msra.mxu0 0
          %636 = vmatprep.subr.bf16.mxu0 0
          %637 = vmatpush1.bf16.xpose.msra.mxu0 0
          %638 = vmatprep.subr.bf16.mxu0 0
          %639 = vmatpush1.bf16.xpose.msra.mxu0 %v622
          %640 = vmatprep.subr.bf16.mxu0 0
          %641 = vmatpush2.bf16.xpose.msra.mxu0 0
          %642 = vmatprep.subr.bf16.mxu0 0
          %643 = vmatpush2.bf16.xpose.msra.mxu0 0
          %644 = vmatprep.subr.bf16.mxu0 0
          %645 = vmatpush2.bf16.xpose.msra.mxu0 0
          %646 = vmatprep.subr.bf16.mxu0 0
          %647 = vmatpush2.bf16.xpose.msra.mxu0 0
          %648 = vmatprep.subr.bf16.mxu0 0
          %649 = vmatpush2.bf16.xpose.msra.mxu0 0
          %650 = vmatprep.subr.bf16.mxu0 0
          %651 = vmatpush2.bf16.xpose.msra.mxu0 0
          %652 = vmatprep.subr.bf16.mxu0 0
          %653 = vmatpush2.bf16.xpose.msra.mxu0 0
          %654 = vmatprep.subr.bf16.mxu0 0
          %655 = vmatpush2.bf16.xpose.msra.mxu0 0
          %656 = vmatprep.mubr.bf16.mxu0 0
          %657 = vmatmul.mubr.bf16.gmra.mxu0 %v619
          %v658 = vpop.f32.mrf.mxu0
          %v659 = vadd.f32 0.0, %v658
          %v660 = vpop.f32.mrf.mxu0
          %v661 = vpop.f32.mrf.mxu0
          %v662 = vadd.f32 0.0, %v661
          %v663 = vpop.f32.mrf.mxu0
          %664 = vdwg.mxu0
          %v667 = vunpack.c.l.b16 %v492
          %v668 = vunpack.c.l.b16 %v493
          %v669 = vpack.c.b16 %v668, %v667
          %v672 = vunpack.c.l.b16 %v474
          %v673 = vunpack.c.l.b16 %v475
          %v674 = vpack.c.b16 %v673, %v672
          %v676 = vsel %vm448, %v669, 0
          %v679 = vsel %vm448, %v674, 0
          %681 = vmatprep.subr.bf16.mxu0 0
          %682 = vmatpush1.bf16.xpose.msra.mxu0 0
          %683 = vmatprep.subr.bf16.mxu0 0
          %684 = vmatpush1.bf16.xpose.msra.mxu0 0
          %685 = vmatprep.subr.bf16.mxu0 0
          %686 = vmatpush1.bf16.xpose.msra.mxu0 0
          %687 = vmatprep.subr.bf16.mxu0 0
          %688 = vmatpush1.bf16.xpose.msra.mxu0 0
          %689 = vmatprep.subr.bf16.mxu0 0
          %690 = vmatpush1.bf16.xpose.msra.mxu0 0
          %691 = vmatprep.subr.bf16.mxu0 0
          %692 = vmatpush1.bf16.xpose.msra.mxu0 0
          %693 = vmatprep.subr.bf16.mxu0 0
          %694 = vmatpush1.bf16.xpose.msra.mxu0 0
          %695 = vmatprep.subr.bf16.mxu0 0
          %696 = vmatpush1.bf16.xpose.msra.mxu0 %v679
          %697 = vmatprep.subr.bf16.mxu0 0
          %698 = vmatpush2.bf16.xpose.msra.mxu0 0
          %699 = vmatprep.subr.bf16.mxu0 0
          %700 = vmatpush2.bf16.xpose.msra.mxu0 0
          %701 = vmatprep.subr.bf16.mxu0 0
          %702 = vmatpush2.bf16.xpose.msra.mxu0 0
          %703 = vmatprep.subr.bf16.mxu0 0
          %704 = vmatpush2.bf16.xpose.msra.mxu0 0
          %705 = vmatprep.subr.bf16.mxu0 0
          %706 = vmatpush2.bf16.xpose.msra.mxu0 0
          %707 = vmatprep.subr.bf16.mxu0 0
          %708 = vmatpush2.bf16.xpose.msra.mxu0 0
          %709 = vmatprep.subr.bf16.mxu0 0
          %710 = vmatpush2.bf16.xpose.msra.mxu0 0
          %711 = vmatprep.subr.bf16.mxu0 0
          %712 = vmatpush2.bf16.xpose.msra.mxu0 0
          %713 = vmatprep.mubr.bf16.mxu0 0
          %714 = vmatmul.mubr.bf16.gmra.mxu0 %v676
          %v715 = vpop.f32.mrf.mxu0
          %v716 = vadd.f32 0.0, %v715
          %v717 = vpop.f32.mrf.mxu0
          %v718 = vpop.f32.mrf.mxu0
          %v719 = vadd.f32 0.0, %v718
          %v720 = vpop.f32.mrf.mxu0
          %721 = vdwg.mxu0
          %v722 = vld [vmem:[#allocation5] sm:$0xff]
          %v723 = vld [vmem:[#allocation5 + $0x8] sm:$0xff]
          %v724 = vld [vmem:[#allocation5 + $0x10] sm:$0xff]
          %v725 = vld [vmem:[#allocation5 + $0x18] sm:$0xff]
          %v726 = vld [vmem:[#allocation5 + $0x20] sm:$0xff]
          %v727 = vld [vmem:[#allocation5 + $0x28] sm:$0xff]
          %v728 = vld [vmem:[#allocation5 + $0x30] sm:$0xff]
          %v729 = vld [vmem:[#allocation5 + $0x38] sm:$0xff]
          %vm730 = vcmask 130048
          %v731 = vsel %vm730, %v545, -inf
          %732 = vmax.xlane.f32.xlu0 %v731
          %v733 = vpop.xlane.xlu0 %732
          %v734 = vsel %vm730, %v548, -inf
          %735 = vmax.xlane.f32.xlu0 %v734
          %v736 = vpop.xlane.xlu0 %735
          %v737 = vsel %vm730, %v602, -inf
          %738 = vmax.xlane.f32.xlu0 %v737
          %v739 = vpop.xlane.xlu0 %738
          %v740 = vsel %vm730, %v605, -inf
          %741 = vmax.xlane.f32.xlu0 %v740
          %v742 = vpop.xlane.xlu0 %741
          %v743 = vsel %vm730, %v659, -inf
          %744 = vmax.xlane.f32.xlu0 %v743
          %v745 = vpop.xlane.xlu0 %744
          %v746 = vsel %vm730, %v662, -inf
          %747 = vmax.xlane.f32.xlu0 %v746
          %v748 = vpop.xlane.xlu0 %747
          %v749 = vsel %vm730, %v716, -inf
          %750 = vmax.xlane.f32.xlu0 %v749
          %v751 = vpop.xlane.xlu0 %750
          %v752 = vsel %vm730, %v719, -inf
          %753 = vmax.xlane.f32.xlu0 %v752
          %v754 = vpop.xlane.xlu0 %753
          %v755 = vmax.f32 %v722, %v733
          %v756 = vmax.f32 %v723, %v736
          %v757 = vmax.f32 %v724, %v739
          %v758 = vmax.f32 %v725, %v742
          %v759 = vmax.f32 %v726, %v745
          %v760 = vmax.f32 %v727, %v748
          %v761 = vmax.f32 %v728, %v751
          %v762 = vmax.f32 %v729, %v754
          %v763 = vsub.f32 %v722, %v755
          %v764 = vsub.f32 %v723, %v756
          %v765 = vsub.f32 %v724, %v757
          %v766 = vsub.f32 %v725, %v758
          %v767 = vsub.f32 %v726, %v759
          %v768 = vsub.f32 %v727, %v760
          %v769 = vsub.f32 %v728, %v761
          %v770 = vsub.f32 %v729, %v762
          %v771 = vmul.f32 %v763, 1.442695
          %v772 = vpow.pop %v771
          %v773 = vmul.f32 %v764, 1.442695
          %v774 = vpow.pop %v773
          %v775 = vmul.f32 %v765, 1.442695
          %v776 = vpow.pop %v775
          %v777 = vmul.f32 %v766, 1.442695
          %v778 = vpow.pop %v777
          %v779 = vmul.f32 %v767, 1.442695
          %v780 = vpow.pop %v779
          %v781 = vmul.f32 %v768, 1.442695
          %v782 = vpow.pop %v781
          %v783 = vmul.f32 %v769, 1.442695
          %v784 = vpow.pop %v783
          %v785 = vmul.f32 %v770, 1.442695
          %v786 = vpow.pop %v785
          %788 = vset.pattern.permute.xlu0 0
          %789 = vperm.xlu0 %788, %v755
          %v790 = vpop.permute.xlu0 %789
          %793 = vset.pattern.permute.xlu0 0
          %794 = vperm.xlu0 %793, %v756
          %v795 = vpop.permute.xlu0 %794
          %798 = vset.pattern.permute.xlu0 0
          %799 = vperm.xlu0 %798, %v757
          %v800 = vpop.permute.xlu0 %799
          %803 = vset.pattern.permute.xlu0 0
          %804 = vperm.xlu0 %803, %v758
          %v805 = vpop.permute.xlu0 %804
          %808 = vset.pattern.permute.xlu0 0
          %809 = vperm.xlu0 %808, %v759
          %v810 = vpop.permute.xlu0 %809
          %813 = vset.pattern.permute.xlu0 0
          %814 = vperm.xlu0 %813, %v760
          %v815 = vpop.permute.xlu0 %814
          %818 = vset.pattern.permute.xlu0 0
          %819 = vperm.xlu0 %818, %v761
          %v820 = vpop.permute.xlu0 %819
          %823 = vset.pattern.permute.xlu0 0
          %824 = vperm.xlu0 %823, %v762
          %v825 = vpop.permute.xlu0 %824
          %v827 = vsub.f32 %v545, %v790
          %v828 = vsub.f32 %v548, %v795
          %v829 = vsub.f32 %v602, %v800
          %v830 = vsub.f32 %v605, %v805
          %v831 = vsub.f32 %v659, %v810
          %v832 = vsub.f32 %v662, %v815
          %v833 = vsub.f32 %v716, %v820
          %v834 = vsub.f32 %v719, %v825
          %v835 = vmul.f32 %v827, 1.442695
          %v836 = vpow.pop %v835
          %v837 = vmul.f32 %v828, 1.442695
          %v838 = vpow.pop %v837
          %v839 = vmul.f32 %v829, 1.442695
          %v840 = vpow.pop %v839
          %v841 = vmul.f32 %v830, 1.442695
          %v842 = vpow.pop %v841
          %v843 = vmul.f32 %v831, 1.442695
          %v844 = vpow.pop %v843
          %v845 = vmul.f32 %v832, 1.442695
          %v846 = vpow.pop %v845
          %v847 = vmul.f32 %v833, 1.442695
          %v848 = vpow.pop %v847
          %v849 = vmul.f32 %v834, 1.442695
          %v850 = vpow.pop %v849
          %v851 = vld [vmem:[#allocation6] sm:$0xff]
          %v852 = vld [vmem:[#allocation6 + $0x8] sm:$0xff]
          %v853 = vld [vmem:[#allocation6 + $0x10] sm:$0xff]
          %v854 = vld [vmem:[#allocation6 + $0x18] sm:$0xff]
          %v855 = vld [vmem:[#allocation6 + $0x20] sm:$0xff]
          %v856 = vld [vmem:[#allocation6 + $0x28] sm:$0xff]
          %v857 = vld [vmem:[#allocation6 + $0x30] sm:$0xff]
          %v858 = vld [vmem:[#allocation6 + $0x38] sm:$0xff]
          %v859 = vmul.f32 %v772, %v851
          %v860 = vmul.f32 %v774, %v852
          %v861 = vmul.f32 %v776, %v853
          %v862 = vmul.f32 %v778, %v854
          %v863 = vmul.f32 %v780, %v855
          %v864 = vmul.f32 %v782, %v856
          %v865 = vmul.f32 %v784, %v857
          %v866 = vmul.f32 %v786, %v858
          %v867 = vsel %vm730, %v836, 0.0
          %868 = vadd.xlane.f32.xlu0 %v867
          %v869 = vpop.xlane.xlu0 %868
          %v870 = vsel %vm730, %v838, 0.0
          %871 = vadd.xlane.f32.xlu0 %v870
          %v872 = vpop.xlane.xlu0 %871
          %v873 = vsel %vm730, %v840, 0.0
          %874 = vadd.xlane.f32.xlu0 %v873
          %v875 = vpop.xlane.xlu0 %874
          %v876 = vsel %vm730, %v842, 0.0
          %877 = vadd.xlane.f32.xlu0 %v876
          %v878 = vpop.xlane.xlu0 %877
          %v879 = vsel %vm730, %v844, 0.0
          %880 = vadd.xlane.f32.xlu0 %v879
          %v881 = vpop.xlane.xlu0 %880
          %v882 = vsel %vm730, %v846, 0.0
          %883 = vadd.xlane.f32.xlu0 %v882
          %v884 = vpop.xlane.xlu0 %883
          %v885 = vsel %vm730, %v848, 0.0
          %886 = vadd.xlane.f32.xlu0 %v885
          %v887 = vpop.xlane.xlu0 %886
          %v888 = vsel %vm730, %v850, 0.0
          %889 = vadd.xlane.f32.xlu0 %v888
          %v890 = vpop.xlane.xlu0 %889
          %v891 = vadd.f32 %v859, %v869
          %v892 = vadd.f32 %v860, %v872
          %v893 = vadd.f32 %v861, %v875
          %v894 = vadd.f32 %v862, %v878
          %v895 = vadd.f32 %v863, %v881
          %v896 = vadd.f32 %v864, %v884
          %v897 = vadd.f32 %v865, %v887
          %v898 = vadd.f32 %v866, %v890
          %899 = vst.msk [vmem:[#allocation6] sm:$0xff] %vm431, %v891
          %900 = vst.msk [vmem:[#allocation6 + $0x8] sm:$0xff] %vm431, %v892
          %901 = vst.msk [vmem:[#allocation6 + $0x10] sm:$0xff] %vm431, %v893
          %902 = vst.msk [vmem:[#allocation6 + $0x18] sm:$0xff] %vm431, %v894
          %903 = vst.msk [vmem:[#allocation6 + $0x20] sm:$0xff] %vm431, %v895
          %904 = vst.msk [vmem:[#allocation6 + $0x28] sm:$0xff] %vm431, %v896
          %905 = vst.msk [vmem:[#allocation6 + $0x30] sm:$0xff] %vm431, %v897
          %906 = vst.msk [vmem:[#allocation6 + $0x38] sm:$0xff] %vm431, %v898
          %v907 = vld [vmem:[#allocation7] sm:$0xff]
          %v908 = vld [vmem:[#allocation7 + $0x8] sm:$0xff]
          %v909 = vld [vmem:[#allocation7 + $0x10] sm:$0xff]
          %v910 = vld [vmem:[#allocation7 + $0x18] sm:$0xff]
          %v911 = vld [vmem:[#allocation7 + $0x20] sm:$0xff]
          %v912 = vld [vmem:[#allocation7 + $0x28] sm:$0xff]
          %v913 = vld [vmem:[#allocation7 + $0x30] sm:$0xff]
          %v914 = vld [vmem:[#allocation7 + $0x38] sm:$0xff]
          %916 = vset.pattern.permute.xlu0 0
          %917 = vperm.xlu0 %916, %v772
          %v918 = vpop.permute.xlu0 %917
          %921 = vset.pattern.permute.xlu0 0
          %922 = vperm.xlu0 %921, %v774
          %v923 = vpop.permute.xlu0 %922
          %926 = vset.pattern.permute.xlu0 0
          %927 = vperm.xlu0 %926, %v776
          %v928 = vpop.permute.xlu0 %927
          %931 = vset.pattern.permute.xlu0 0
          %932 = vperm.xlu0 %931, %v778
          %v933 = vpop.permute.xlu0 %932
          %936 = vset.pattern.permute.xlu0 0
          %937 = vperm.xlu0 %936, %v780
          %v938 = vpop.permute.xlu0 %937
          %941 = vset.pattern.permute.xlu0 0
          %942 = vperm.xlu0 %941, %v782
          %v943 = vpop.permute.xlu0 %942
          %946 = vset.pattern.permute.xlu0 0
          %947 = vperm.xlu0 %946, %v784
          %v948 = vpop.permute.xlu0 %947
          %951 = vset.pattern.permute.xlu0 0
          %952 = vperm.xlu0 %951, %v786
          %v953 = vpop.permute.xlu0 %952
          %v955 = vmul.f32 %v918, %v907
          %v956 = vmul.f32 %v923, %v908
          %v957 = vmul.f32 %v928, %v909
          %v958 = vmul.f32 %v933, %v910
          %v959 = vmul.f32 %v938, %v911
          %v960 = vmul.f32 %v943, %v912
          %v961 = vmul.f32 %v948, %v913
          %v962 = vmul.f32 %v953, %v914
          %v963 = vpack.c.bf16 %v838, %v836
          %v964 = vpack.c.bf16 %v842, %v840
          %v965 = vpack.c.bf16 %v846, %v844
          %v966 = vpack.c.bf16 %v850, %v848
          %v969 = vunpack.c.l.b16 %v478
          %v970 = vunpack.c.l.b16 %v479
          %v971 = vpack.c.b16 %v970, %v969
          %v974 = vsel %vm730, %v963, 0
          %976 = vmatprep.subr.bf16.mxu0 0
          %977 = vmatpush1.bf16.msra.mxu0 0
          %978 = vmatprep.subr.bf16.mxu0 0
          %979 = vmatpush1.bf16.msra.mxu0 0
          %980 = vmatprep.subr.bf16.mxu0 0
          %981 = vmatpush1.bf16.msra.mxu0 0
          %982 = vmatprep.subr.bf16.mxu0 0
          %983 = vmatpush1.bf16.msra.mxu0 0
          %984 = vmatprep.subr.bf16.mxu0 0
          %985 = vmatpush1.bf16.msra.mxu0 0
          %986 = vmatprep.subr.bf16.mxu0 0
          %987 = vmatpush1.bf16.msra.mxu0 0
          %988 = vmatprep.subr.bf16.mxu0 0
          %989 = vmatpush1.bf16.msra.mxu0 0
          %990 = vmatprep.subr.bf16.mxu0 0
          %991 = vmatpush1.bf16.msra.mxu0 %v971
          %992 = vmatprep.subr.bf16.mxu0 0
          %993 = vmatpush2.bf16.msra.mxu0 0
          %994 = vmatprep.subr.bf16.mxu0 0
          %995 = vmatpush2.bf16.msra.mxu0 0
          %996 = vmatprep.subr.bf16.mxu0 0
          %997 = vmatpush2.bf16.msra.mxu0 0
          %998 = vmatprep.subr.bf16.mxu0 0
          %999 = vmatpush2.bf16.msra.mxu0 0
          %1000 = vmatprep.subr.bf16.mxu0 0
          %1001 = vmatpush2.bf16.msra.mxu0 0
          %1002 = vmatprep.subr.bf16.mxu0 0
          %1003 = vmatpush2.bf16.msra.mxu0 0
          %1004 = vmatprep.subr.bf16.mxu0 0
          %1005 = vmatpush2.bf16.msra.mxu0 0
          %1006 = vmatprep.subr.bf16.mxu0 0
          %1007 = vmatpush2.bf16.msra.mxu0 0
          %1008 = vmatprep.mubr.bf16.mxu0 0
          %1009 = vmatmul.mubr.bf16.gmra.mxu0 %v974
          %v1010 = vpop.f32.mrf.mxu0
          %v1011 = vadd.f32 0.0, %v1010
          %v1012 = vpop.f32.mrf.mxu0
          %v1013 = vpop.f32.mrf.mxu0
          %v1014 = vadd.f32 0.0, %v1013
          %v1015 = vpop.f32.mrf.mxu0
          %1016 = vdwg.mxu0
          %v1019 = vunpack.c.l.b16 %v480
          %v1020 = vunpack.c.l.b16 %v481
          %v1021 = vpack.c.b16 %v1020, %v1019
          %v1024 = vsel %vm730, %v964, 0
          %1026 = vmatprep.subr.bf16.mxu0 0
          %1027 = vmatpush1.bf16.msra.mxu0 0
          %1028 = vmatprep.subr.bf16.mxu0 0
          %1029 = vmatpush1.bf16.msra.mxu0 0
          %1030 = vmatprep.subr.bf16.mxu0 0
          %1031 = vmatpush1.bf16.msra.mxu0 0
          %1032 = vmatprep.subr.bf16.mxu0 0
          %1033 = vmatpush1.bf16.msra.mxu0 0
          %1034 = vmatprep.subr.bf16.mxu0 0
          %1035 = vmatpush1.bf16.msra.mxu0 0
          %1036 = vmatprep.subr.bf16.mxu0 0
          %1037 = vmatpush1.bf16.msra.mxu0 0
          %1038 = vmatprep.subr.bf16.mxu0 0
          %1039 = vmatpush1.bf16.msra.mxu0 0
          %1040 = vmatprep.subr.bf16.mxu0 0
          %1041 = vmatpush1.bf16.msra.mxu0 %v1021
          %1042 = vmatprep.subr.bf16.mxu0 0
          %1043 = vmatpush2.bf16.msra.mxu0 0
          %1044 = vmatprep.subr.bf16.mxu0 0
          %1045 = vmatpush2.bf16.msra.mxu0 0
          %1046 = vmatprep.subr.bf16.mxu0 0
          %1047 = vmatpush2.bf16.msra.mxu0 0
          %1048 = vmatprep.subr.bf16.mxu0 0
          %1049 = vmatpush2.bf16.msra.mxu0 0
          %1050 = vmatprep.subr.bf16.mxu0 0
          %1051 = vmatpush2.bf16.msra.mxu0 0
          %1052 = vmatprep.subr.bf16.mxu0 0
          %1053 = vmatpush2.bf16.msra.mxu0 0
          %1054 = vmatprep.subr.bf16.mxu0 0
          %1055 = vmatpush2.bf16.msra.mxu0 0
          %1056 = vmatprep.subr.bf16.mxu0 0
          %1057 = vmatpush2.bf16.msra.mxu0 0
          %1058 = vmatprep.mubr.bf16.mxu0 0
          %1059 = vmatmul.mubr.bf16.gmra.mxu0 %v1024
          %v1060 = vpop.f32.mrf.mxu0
          %v1061 = vadd.f32 0.0, %v1060
          %v1062 = vpop.f32.mrf.mxu0
          %v1063 = vpop.f32.mrf.mxu0
          %v1064 = vadd.f32 0.0, %v1063
          %v1065 = vpop.f32.mrf.mxu0
          %1066 = vdwg.mxu0
          %v1069 = vunpack.c.l.b16 %v482
          %v1070 = vunpack.c.l.b16 %v483
          %v1071 = vpack.c.b16 %v1070, %v1069
          %v1074 = vsel %vm730, %v965, 0
          %1076 = vmatprep.subr.bf16.mxu0 0
          %1077 = vmatpush1.bf16.msra.mxu0 0
          %1078 = vmatprep.subr.bf16.mxu0 0
          %1079 = vmatpush1.bf16.msra.mxu0 0
          %1080 = vmatprep.subr.bf16.mxu0 0
          %1081 = vmatpush1.bf16.msra.mxu0 0
          %1082 = vmatprep.subr.bf16.mxu0 0
          %1083 = vmatpush1.bf16.msra.mxu0 0
          %1084 = vmatprep.subr.bf16.mxu0 0
          %1085 = vmatpush1.bf16.msra.mxu0 0
          %1086 = vmatprep.subr.bf16.mxu0 0
          %1087 = vmatpush1.bf16.msra.mxu0 0
          %1088 = vmatprep.subr.bf16.mxu0 0
          %1089 = vmatpush1.bf16.msra.mxu0 0
          %1090 = vmatprep.subr.bf16.mxu0 0
          %1091 = vmatpush1.bf16.msra.mxu0 %v1071
          %1092 = vmatprep.subr.bf16.mxu0 0
          %1093 = vmatpush2.bf16.msra.mxu0 0
          %1094 = vmatprep.subr.bf16.mxu0 0
          %1095 = vmatpush2.bf16.msra.mxu0 0
          %1096 = vmatprep.subr.bf16.mxu0 0
          %1097 = vmatpush2.bf16.msra.mxu0 0
          %1098 = vmatprep.subr.bf16.mxu0 0
          %1099 = vmatpush2.bf16.msra.mxu0 0
          %1100 = vmatprep.subr.bf16.mxu0 0
          %1101 = vmatpush2.bf16.msra.mxu0 0
          %1102 = vmatprep.subr.bf16.mxu0 0
          %1103 = vmatpush2.bf16.msra.mxu0 0
          %1104 = vmatprep.subr.bf16.mxu0 0
          %1105 = vmatpush2.bf16.msra.mxu0 0
          %1106 = vmatprep.subr.bf16.mxu0 0
          %1107 = vmatpush2.bf16.msra.mxu0 0
          %1108 = vmatprep.mubr.bf16.mxu0 0
          %1109 = vmatmul.mubr.bf16.gmra.mxu0 %v1074
          %v1110 = vpop.f32.mrf.mxu0
          %v1111 = vadd.f32 0.0, %v1110
          %v1112 = vpop.f32.mrf.mxu0
          %v1113 = vpop.f32.mrf.mxu0
          %v1114 = vadd.f32 0.0, %v1113
          %v1115 = vpop.f32.mrf.mxu0
          %1116 = vdwg.mxu0
          %v1119 = vunpack.c.l.b16 %v484
          %v1120 = vunpack.c.l.b16 %v485
          %v1121 = vpack.c.b16 %v1120, %v1119
          %v1124 = vsel %vm730, %v966, 0
          %1126 = vmatprep.subr.bf16.mxu0 0
          %1127 = vmatpush1.bf16.msra.mxu0 0
          %1128 = vmatprep.subr.bf16.mxu0 0
          %1129 = vmatpush1.bf16.msra.mxu0 0
          %1130 = vmatprep.subr.bf16.mxu0 0
          %1131 = vmatpush1.bf16.msra.mxu0 0
          %1132 = vmatprep.subr.bf16.mxu0 0
          %1133 = vmatpush1.bf16.msra.mxu0 0
          %1134 = vmatprep.subr.bf16.mxu0 0
          %1135 = vmatpush1.bf16.msra.mxu0 0
          %1136 = vmatprep.subr.bf16.mxu0 0
          %1137 = vmatpush1.bf16.msra.mxu0 0
          %1138 = vmatprep.subr.bf16.mxu0 0
          %1139 = vmatpush1.bf16.msra.mxu0 0
          %1140 = vmatprep.subr.bf16.mxu0 0
          %1141 = vmatpush1.bf16.msra.mxu0 %v1121
          %1142 = vmatprep.subr.bf16.mxu0 0
          %1143 = vmatpush2.bf16.msra.mxu0 0
          %1144 = vmatprep.subr.bf16.mxu0 0
          %1145 = vmatpush2.bf16.msra.mxu0 0
          %1146 = vmatprep.subr.bf16.mxu0 0
          %1147 = vmatpush2.bf16.msra.mxu0 0
          %1148 = vmatprep.subr.bf16.mxu0 0
          %1149 = vmatpush2.bf16.msra.mxu0 0
          %1150 = vmatprep.subr.bf16.mxu0 0
          %1151 = vmatpush2.bf16.msra.mxu0 0
          %1152 = vmatprep.subr.bf16.mxu0 0
          %1153 = vmatpush2.bf16.msra.mxu0 0
          %1154 = vmatprep.subr.bf16.mxu0 0
          %1155 = vmatpush2.bf16.msra.mxu0 0
          %1156 = vmatprep.subr.bf16.mxu0 0
          %1157 = vmatpush2.bf16.msra.mxu0 0
          %1158 = vmatprep.mubr.bf16.mxu0 0
          %1159 = vmatmul.mubr.bf16.gmra.mxu0 %v1124
          %v1160 = vpop.f32.mrf.mxu0
          %v1161 = vadd.f32 0.0, %v1160
          %v1162 = vpop.f32.mrf.mxu0
          %v1163 = vpop.f32.mrf.mxu0
          %v1164 = vadd.f32 0.0, %v1163
          %v1165 = vpop.f32.mrf.mxu0
          %1166 = vdwg.mxu0
          %v1167 = vadd.f32 %v955, %v1011
          %v1168 = vadd.f32 %v956, %v1014
          %v1169 = vadd.f32 %v957, %v1061
          %v1170 = vadd.f32 %v958, %v1064
          %v1171 = vadd.f32 %v959, %v1111
          %v1172 = vadd.f32 %v960, %v1114
          %v1173 = vadd.f32 %v961, %v1161
          %v1174 = vadd.f32 %v962, %v1164
          %1175 = vst.msk [vmem:[#allocation7] sm:$0xff] %vm448, %v1167
          %1176 = vst.msk [vmem:[#allocation7 + $0x8] sm:$0xff] %vm448, %v1168
          %1177 = vst.msk [vmem:[#allocation7 + $0x10] sm:$0xff] %vm448, %v1169
          %1178 = vst.msk [vmem:[#allocation7 + $0x18] sm:$0xff] %vm448, %v1170
          %1179 = vst.msk [vmem:[#allocation7 + $0x20] sm:$0xff] %vm448, %v1171
          %1180 = vst.msk [vmem:[#allocation7 + $0x28] sm:$0xff] %vm448, %v1172
          %1181 = vst.msk [vmem:[#allocation7 + $0x30] sm:$0xff] %vm448, %v1173
          %1182 = vst.msk [vmem:[#allocation7 + $0x38] sm:$0xff] %vm448, %v1174
          %1183 = vst.msk [vmem:[#allocation5] sm:$0xff] %vm431, %v755
          %1184 = vst.msk [vmem:[#allocation5 + $0x8] sm:$0xff] %vm431, %v756
          %1185 = vst.msk [vmem:[#allocation5 + $0x10] sm:$0xff] %vm431, %v757
          %1186 = vst.msk [vmem:[#allocation5 + $0x18] sm:$0xff] %vm431, %v758
          %1187 = vst.msk [vmem:[#allocation5 + $0x20] sm:$0xff] %vm431, %v759
          %1188 = vst.msk [vmem:[#allocation5 + $0x28] sm:$0xff] %vm431, %v760
          %1189 = vst.msk [vmem:[#allocation5 + $0x30] sm:$0xff] %vm431, %v761
          %1190 = vst.msk [vmem:[#allocation5 + $0x38] sm:$0xff] %vm431, %v762
        $region49: #{tpu_custom_call.1} parent=31 // loop_footer
          %s460 = sadd.s32 %s458, 1
        $region50: #{tpu_custom_call.1} parent=31 // loop_footer_branch
          %457 = sbr.rel target = $region46
        $region51: #{tpu_custom_call.1} parent=31 // loop_exit
          _
        %v1191 = vlaneseq
        %v1192 = vshrl.u32 %v1191, 7
        %v1193 = vadd.s32 %v1192, 8
        %v1194 = vlaneseq
        %v1195 = vand.u32 %v1194, 127
        %vm1196 = vcmp.le.s32.totalorder %v1195, %v1192
        %vm1197 = vcmp.le.s32.totalorder %v1195, %v1193
        %v1198 = vld [vmem:[%s328] sm:$0xf]
        %v1199 = vld [vmem:[%s328 + $0x4] sm:$0xf]
        %v1200 = vld [vmem:[%s328 + $0x8] sm:$0xf]
        %v1201 = vld [vmem:[%s328 + $0xc] sm:$0xf]
        %v1202 = vld [vmem:[%s328 + $0x10] sm:$0xf]
        %v1203 = vld [vmem:[%s328 + $0x14] sm:$0xf]
        %v1204 = vld [vmem:[%s328 + $0x18] sm:$0xf]
        %v1205 = vld [vmem:[%s328 + $0x1c] sm:$0xf]
        %v1206 = vld [vmem:[%s338] sm:$0xf]
        %v1207 = vld [vmem:[%s338 + $0x4] sm:$0xf]
        %v1208 = vld [vmem:[%s338 + $0x8] sm:$0xf]
        %v1209 = vld [vmem:[%s338 + $0xc] sm:$0xf]
        %v1210 = vld [vmem:[%s338 + $0x10] sm:$0xf]
        %v1211 = vld [vmem:[%s338 + $0x14] sm:$0xf]
        %v1212 = vld [vmem:[%s338 + $0x18] sm:$0xf]
        %v1213 = vld [vmem:[%s338 + $0x1c] sm:$0xf]
        %v1214 = vld [vmem:[#allocation4] sm:$0xf]
        %v1215 = vld [vmem:[#allocation4 + $0x4] sm:$0xf]
        %v1216 = vld [vmem:[#allocation4 + $0x8] sm:$0xf]
        %v1217 = vld [vmem:[#allocation4 + $0xc] sm:$0xf]
        %v1218 = vld [vmem:[#allocation4 + $0x10] sm:$0xf]
        %v1219 = vld [vmem:[#allocation4 + $0x14] sm:$0xf]
        %v1220 = vld [vmem:[#allocation4 + $0x18] sm:$0xf]
        %v1221 = vld [vmem:[#allocation4 + $0x1c] sm:$0xf]
        %v1224 = vunpack.c.l.b16 %v1214
        %v1225 = vunpack.c.l.b16 %v1215
        %v1226 = vpack.c.b16 %v1225, %v1224
        %v1229 = vunpack.c.l.b16 %v1198
        %v1230 = vunpack.c.l.b16 %v1199
        %v1231 = vpack.c.b16 %v1230, %v1229
        %v1233 = vsel %vm448, %v1226, 0
        %v1236 = vsel %vm448, %v1231, 0
        %1238 = vmatprep.subr.bf16.mxu0 0
        %1239 = vmatpush1.bf16.xpose.msra.mxu0 0
        %1240 = vmatprep.subr.bf16.mxu0 0
        %1241 = vmatpush1.bf16.xpose.msra.mxu0 0
        %1242 = vmatprep.subr.bf16.mxu0 0
        %1243 = vmatpush1.bf16.xpose.msra.mxu0 0
        %1244 = vmatprep.subr.bf16.mxu0 0
        %1245 = vmatpush1.bf16.xpose.msra.mxu0 0
        %1246 = vmatprep.subr.bf16.mxu0 0
        %1247 = vmatpush1.bf16.xpose.msra.mxu0 0
        %1248 = vmatprep.subr.bf16.mxu0 0
        %1249 = vmatpush1.bf16.xpose.msra.mxu0 0
        %1250 = vmatprep.subr.bf16.mxu0 0
        %1251 = vmatpush1.bf16.xpose.msra.mxu0 0
        %1252 = vmatprep.subr.bf16.mxu0 0
        %1253 = vmatpush1.bf16.xpose.msra.mxu0 %v1236
        %1254 = vmatprep.subr.bf16.mxu0 0
        %1255 = vmatpush2.bf16.xpose.msra.mxu0 0
        %1256 = vmatprep.subr.bf16.mxu0 0
        %1257 = vmatpush2.bf16.xpose.msra.mxu0 0
        %1258 = vmatprep.subr.bf16.mxu0 0
        %1259 = vmatpush2.bf16.xpose.msra.mxu0 0
        %1260 = vmatprep.subr.bf16.mxu0 0
        %1261 = vmatpush2.bf16.xpose.msra.mxu0 0
        %1262 = vmatprep.subr.bf16.mxu0 0
        %1263 = vmatpush2.bf16.xpose.msra.mxu0 0
        %1264 = vmatprep.subr.bf16.mxu0 0
        %1265 = vmatpush2.bf16.xpose.msra.mxu0 0
        %1266 = vmatprep.subr.bf16.mxu0 0
        %1267 = vmatpush2.bf16.xpose.msra.mxu0 0
        %1268 = vmatprep.subr.bf16.mxu0 0
        %1269 = vmatpush2.bf16.xpose.msra.mxu0 0
        %1270 = vmatprep.mubr.bf16.mxu0 0
        %1271 = vmatmul.mubr.bf16.gmra.mxu0 %v1233
        %v1272 = vpop.f32.mrf.mxu0
        %v1273 = vadd.f32 0.0, %v1272
        %v1274 = vpop.f32.mrf.mxu0
        %v1275 = vpop.f32.mrf.mxu0
        %v1276 = vadd.f32 0.0, %v1275
        %v1277 = vpop.f32.mrf.mxu0
        %1278 = vdwg.mxu0
        %v1281 = vunpack.c.l.b16 %v1216
        %v1282 = vunpack.c.l.b16 %v1217
        %v1283 = vpack.c.b16 %v1282, %v1281
        %v1286 = vunpack.c.l.b16 %v1200
        %v1287 = vunpack.c.l.b16 %v1201
        %v1288 = vpack.c.b16 %v1287, %v1286
        %v1290 = vsel %vm448, %v1283, 0
        %v1293 = vsel %vm448, %v1288, 0
        %1295 = vmatprep.subr.bf16.mxu0 0
        %1296 = vmatpush1.bf16.xpose.msra.mxu0 0
        %1297 = vmatprep.subr.bf16.mxu0 0
        %1298 = vmatpush1.bf16.xpose.msra.mxu0 0
        %1299 = vmatprep.subr.bf16.mxu0 0
        %1300 = vmatpush1.bf16.xpose.msra.mxu0 0
        %1301 = vmatprep.subr.bf16.mxu0 0
        %1302 = vmatpush1.bf16.xpose.msra.mxu0 0
        %1303 = vmatprep.subr.bf16.mxu0 0
        %1304 = vmatpush1.bf16.xpose.msra.mxu0 0
        %1305 = vmatprep.subr.bf16.mxu0 0
        %1306 = vmatpush1.bf16.xpose.msra.mxu0 0
        %1307 = vmatprep.subr.bf16.mxu0 0
        %1308 = vmatpush1.bf16.xpose.msra.mxu0 0
        %1309 = vmatprep.subr.bf16.mxu0 0
        %1310 = vmatpush1.bf16.xpose.msra.mxu0 %v1293
        %1311 = vmatprep.subr.bf16.mxu0 0
        %1312 = vmatpush2.bf16.xpose.msra.mxu0 0
        %1313 = vmatprep.subr.bf16.mxu0 0
        %1314 = vmatpush2.bf16.xpose.msra.mxu0 0
        %1315 = vmatprep.subr.bf16.mxu0 0
        %1316 = vmatpush2.bf16.xpose.msra.mxu0 0
        %1317 = vmatprep.subr.bf16.mxu0 0
        %1318 = vmatpush2.bf16.xpose.msra.mxu0 0
        %1319 = vmatprep.subr.bf16.mxu0 0
        %1320 = vmatpush2.bf16.xpose.msra.mxu0 0
        %1321 = vmatprep.subr.bf16.mxu0 0
        %1322 = vmatpush2.bf16.xpose.msra.mxu0 0
        %1323 = vmatprep.subr.bf16.mxu0 0
        %1324 = vmatpush2.bf16.xpose.msra.mxu0 0
        %1325 = vmatprep.subr.bf16.mxu0 0
        %1326 = vmatpush2.bf16.xpose.msra.mxu0 0
        %1327 = vmatprep.mubr.bf16.mxu0 0
        %1328 = vmatmul.mubr.bf16.gmra.mxu0 %v1290
        %v1329 = vpop.f32.mrf.mxu0
        %v1330 = vadd.f32 0.0, %v1329
        %v1331 = vpop.f32.mrf.mxu0
        %v1332 = vpop.f32.mrf.mxu0
        %v1333 = vadd.f32 0.0, %v1332
        %v1334 = vpop.f32.mrf.mxu0
        %1335 = vdwg.mxu0
        %v1338 = vunpack.c.l.b16 %v1218
        %v1339 = vunpack.c.l.b16 %v1219
        %v1340 = vpack.c.b16 %v1339, %v1338
        %v1343 = vunpack.c.l.b16 %v1202
        %v1344 = vunpack.c.l.b16 %v1203
        %v1345 = vpack.c.b16 %v1344, %v1343
        %v1347 = vsel %vm448, %v1340, 0
        %v1350 = vsel %vm448, %v1345, 0
        %1352 = vmatprep.subr.bf16.mxu0 0
        %1353 = vmatpush1.bf16.xpose.msra.mxu0 0
        %1354 = vmatprep.subr.bf16.mxu0 0
        %1355 = vmatpush1.bf16.xpose.msra.mxu0 0
        %1356 = vmatprep.subr.bf16.mxu0 0
        %1357 = vmatpush1.bf16.xpose.msra.mxu0 0
        %1358 = vmatprep.subr.bf16.mxu0 0
        %1359 = vmatpush1.bf16.xpose.msra.mxu0 0
        %1360 = vmatprep.subr.bf16.mxu0 0
        %1361 = vmatpush1.bf16.xpose.msra.mxu0 0
        %1362 = vmatprep.subr.bf16.mxu0 0
        %1363 = vmatpush1.bf16.xpose.msra.mxu0 0
        %1364 = vmatprep.subr.bf16.mxu0 0
        %1365 = vmatpush1.bf16.xpose.msra.mxu0 0
        %1366 = vmatprep.subr.bf16.mxu0 0
        %1367 = vmatpush1.bf16.xpose.msra.mxu0 %v1350
        %1368 = vmatprep.subr.bf16.mxu0 0
        %1369 = vmatpush2.bf16.xpose.msra.mxu0 0
        %1370 = vmatprep.subr.bf16.mxu0 0
        %1371 = vmatpush2.bf16.xpose.msra.mxu0 0
        %1372 = vmatprep.subr.bf16.mxu0 0
        %1373 = vmatpush2.bf16.xpose.msra.mxu0 0
        %1374 = vmatprep.subr.bf16.mxu0 0
        %1375 = vmatpush2.bf16.xpose.msra.mxu0 0
        %1376 = vmatprep.subr.bf16.mxu0 0
        %1377 = vmatpush2.bf16.xpose.msra.mxu0 0
        %1378 = vmatprep.subr.bf16.mxu0 0
        %1379 = vmatpush2.bf16.xpose.msra.mxu0 0
        %1380 = vmatprep.subr.bf16.mxu0 0
        %1381 = vmatpush2.bf16.xpose.msra.mxu0 0
        %1382 = vmatprep.subr.bf16.mxu0 0
        %1383 = vmatpush2.bf16.xpose.msra.mxu0 0
        %1384 = vmatprep.mubr.bf16.mxu0 0
        %1385 = vmatmul.mubr.bf16.gmra.mxu0 %v1347
        %v1386 = vpop.f32.mrf.mxu0
        %v1387 = vadd.f32 0.0, %v1386
        %v1388 = vpop.f32.mrf.mxu0
        %v1389 = vpop.f32.mrf.mxu0
        %v1390 = vadd.f32 0.0, %v1389
        %v1391 = vpop.f32.mrf.mxu0
        %1392 = vdwg.mxu0
        %v1395 = vunpack.c.l.b16 %v1220
        %v1396 = vunpack.c.l.b16 %v1221
        %v1397 = vpack.c.b16 %v1396, %v1395
        %v1400 = vunpack.c.l.b16 %v1204
        %v1401 = vunpack.c.l.b16 %v1205
        %v1402 = vpack.c.b16 %v1401, %v1400
        %v1404 = vsel %vm448, %v1397, 0
        %v1407 = vsel %vm448, %v1402, 0
        %1409 = vmatprep.subr.bf16.mxu0 0
        %1410 = vmatpush1.bf16.xpose.msra.mxu0 0
        %1411 = vmatprep.subr.bf16.mxu0 0
        %1412 = vmatpush1.bf16.xpose.msra.mxu0 0
        %1413 = vmatprep.subr.bf16.mxu0 0
        %1414 = vmatpush1.bf16.xpose.msra.mxu0 0
        %1415 = vmatprep.subr.bf16.mxu0 0
        %1416 = vmatpush1.bf16.xpose.msra.mxu0 0
        %1417 = vmatprep.subr.bf16.mxu0 0
        %1418 = vmatpush1.bf16.xpose.msra.mxu0 0
        %1419 = vmatprep.subr.bf16.mxu0 0
        %1420 = vmatpush1.bf16.xpose.msra.mxu0 0
        %1421 = vmatprep.subr.bf16.mxu0 0
        %1422 = vmatpush1.bf16.xpose.msra.mxu0 0
        %1423 = vmatprep.subr.bf16.mxu0 0
        %1424 = vmatpush1.bf16.xpose.msra.mxu0 %v1407
        %1425 = vmatprep.subr.bf16.mxu0 0
        %1426 = vmatpush2.bf16.xpose.msra.mxu0 0
        %1427 = vmatprep.subr.bf16.mxu0 0
        %1428 = vmatpush2.bf16.xpose.msra.mxu0 0
        %1429 = vmatprep.subr.bf16.mxu0 0
        %1430 = vmatpush2.bf16.xpose.msra.mxu0 0
        %1431 = vmatprep.subr.bf16.mxu0 0
        %1432 = vmatpush2.bf16.xpose.msra.mxu0 0
        %1433 = vmatprep.subr.bf16.mxu0 0
        %1434 = vmatpush2.bf16.xpose.msra.mxu0 0
        %1435 = vmatprep.subr.bf16.mxu0 0
        %1436 = vmatpush2.bf16.xpose.msra.mxu0 0
        %1437 = vmatprep.subr.bf16.mxu0 0
        %1438 = vmatpush2.bf16.xpose.msra.mxu0 0
        %1439 = vmatprep.subr.bf16.mxu0 0
        %1440 = vmatpush2.bf16.xpose.msra.mxu0 0
        %1441 = vmatprep.mubr.bf16.mxu0 0
        %1442 = vmatmul.mubr.bf16.gmra.mxu0 %v1404
        %v1443 = vpop.f32.mrf.mxu0
        %v1444 = vadd.f32 0.0, %v1443
        %v1445 = vpop.f32.mrf.mxu0
        %v1446 = vpop.f32.mrf.mxu0
        %v1447 = vadd.f32 0.0, %v1446
        %v1448 = vpop.f32.mrf.mxu0
        %1449 = vdwg.mxu0
        %v1450 = vsel %vm1196, 1, 0
        %v1451 = vsel %vm1197, 1, 0
        %vm1452 = vcmp.eq.s32.totalorder %v1450, 1
        %vm1453 = vcmp.eq.s32.totalorder %v1451, 1
        %v1454 = vsel %vm1452, %v1273, -inf
        %v1455 = vsel %vm1453, %v1276, -inf
        %v1456 = vsel %vm1452, %v1330, -inf
        %v1457 = vsel %vm1453, %v1333, -inf
        %v1458 = vsel %vm1452, %v1387, -inf
        %v1459 = vsel %vm1453, %v1390, -inf
        %v1460 = vsel %vm1452, %v1444, -inf
        %v1461 = vsel %vm1453, %v1447, -inf
        %v1462 = vld [vmem:[#allocation5] sm:$0xff]
        %v1463 = vld [vmem:[#allocation5 + $0x8] sm:$0xff]
        %v1464 = vld [vmem:[#allocation5 + $0x10] sm:$0xff]
        %v1465 = vld [vmem:[#allocation5 + $0x18] sm:$0xff]
        %v1466 = vld [vmem:[#allocation5 + $0x20] sm:$0xff]
        %v1467 = vld [vmem:[#allocation5 + $0x28] sm:$0xff]
        %v1468 = vld [vmem:[#allocation5 + $0x30] sm:$0xff]
        %v1469 = vld [vmem:[#allocation5 + $0x38] sm:$0xff]
        %vm1470 = vcmask 130048
        %v1471 = vsel %vm1470, %v1454, -inf
        %1472 = vmax.xlane.f32.xlu0 %v1471
        %v1473 = vpop.xlane.xlu0 %1472
        %v1474 = vsel %vm1470, %v1455, -inf
        %1475 = vmax.xlane.f32.xlu0 %v1474
        %v1476 = vpop.xlane.xlu0 %1475
        %v1477 = vsel %vm1470, %v1456, -inf
        %1478 = vmax.xlane.f32.xlu0 %v1477
        %v1479 = vpop.xlane.xlu0 %1478
        %v1480 = vsel %vm1470, %v1457, -inf
        %1481 = vmax.xlane.f32.xlu0 %v1480
        %v1482 = vpop.xlane.xlu0 %1481
        %v1483 = vsel %vm1470, %v1458, -inf
        %1484 = vmax.xlane.f32.xlu0 %v1483
        %v1485 = vpop.xlane.xlu0 %1484
        %v1486 = vsel %vm1470, %v1459, -inf
        %1487 = vmax.xlane.f32.xlu0 %v1486
        %v1488 = vpop.xlane.xlu0 %1487
        %v1489 = vsel %vm1470, %v1460, -inf
        %1490 = vmax.xlane.f32.xlu0 %v1489
        %v1491 = vpop.xlane.xlu0 %1490
        %v1492 = vsel %vm1470, %v1461, -inf
        %1493 = vmax.xlane.f32.xlu0 %v1492
        %v1494 = vpop.xlane.xlu0 %1493
        %v1495 = vmax.f32 %v1462, %v1473
        %v1496 = vmax.f32 %v1463, %v1476
        %v1497 = vmax.f32 %v1464, %v1479
        %v1498 = vmax.f32 %v1465, %v1482
        %v1499 = vmax.f32 %v1466, %v1485
        %v1500 = vmax.f32 %v1467, %v1488
        %v1501 = vmax.f32 %v1468, %v1491
        %v1502 = vmax.f32 %v1469, %v1494
        %v1503 = vsub.f32 %v1462, %v1495
        %v1504 = vsub.f32 %v1463, %v1496
        %v1505 = vsub.f32 %v1464, %v1497
        %v1506 = vsub.f32 %v1465, %v1498
        %v1507 = vsub.f32 %v1466, %v1499
        %v1508 = vsub.f32 %v1467, %v1500
        %v1509 = vsub.f32 %v1468, %v1501
        %v1510 = vsub.f32 %v1469, %v1502
        %v1511 = vmul.f32 %v1503, 1.442695
        %v1512 = vpow.pop %v1511
        %v1513 = vmul.f32 %v1504, 1.442695
        %v1514 = vpow.pop %v1513
        %v1515 = vmul.f32 %v1505, 1.442695
        %v1516 = vpow.pop %v1515
        %v1517 = vmul.f32 %v1506, 1.442695
        %v1518 = vpow.pop %v1517
        %v1519 = vmul.f32 %v1507, 1.442695
        %v1520 = vpow.pop %v1519
        %v1521 = vmul.f32 %v1508, 1.442695
        %v1522 = vpow.pop %v1521
        %v1523 = vmul.f32 %v1509, 1.442695
        %v1524 = vpow.pop %v1523
        %v1525 = vmul.f32 %v1510, 1.442695
        %v1526 = vpow.pop %v1525
        %1528 = vset.pattern.permute.xlu0 0
        %1529 = vperm.xlu0 %1528, %v1495
        %v1530 = vpop.permute.xlu0 %1529
        %1533 = vset.pattern.permute.xlu0 0
        %1534 = vperm.xlu0 %1533, %v1496
        %v1535 = vpop.permute.xlu0 %1534
        %1538 = vset.pattern.permute.xlu0 0
        %1539 = vperm.xlu0 %1538, %v1497
        %v1540 = vpop.permute.xlu0 %1539
        %1543 = vset.pattern.permute.xlu0 0
        %1544 = vperm.xlu0 %1543, %v1498
        %v1545 = vpop.permute.xlu0 %1544
        %1548 = vset.pattern.permute.xlu0 0
        %1549 = vperm.xlu0 %1548, %v1499
        %v1550 = vpop.permute.xlu0 %1549
        %1553 = vset.pattern.permute.xlu0 0
        %1554 = vperm.xlu0 %1553, %v1500
        %v1555 = vpop.permute.xlu0 %1554
        %1558 = vset.pattern.permute.xlu0 0
        %1559 = vperm.xlu0 %1558, %v1501
        %v1560 = vpop.permute.xlu0 %1559
        %1563 = vset.pattern.permute.xlu0 0
        %1564 = vperm.xlu0 %1563, %v1502
        %v1565 = vpop.permute.xlu0 %1564
        %v1567 = vsub.f32 %v1454, %v1530
        %v1568 = vsub.f32 %v1455, %v1535
        %v1569 = vsub.f32 %v1456, %v1540
        %v1570 = vsub.f32 %v1457, %v1545
        %v1571 = vsub.f32 %v1458, %v1550
        %v1572 = vsub.f32 %v1459, %v1555
        %v1573 = vsub.f32 %v1460, %v1560
        %v1574 = vsub.f32 %v1461, %v1565
        %v1575 = vmul.f32 %v1567, 1.442695
        %v1576 = vpow.pop %v1575
        %v1577 = vmul.f32 %v1568, 1.442695
        %v1578 = vpow.pop %v1577
        %v1579 = vmul.f32 %v1569, 1.442695
        %v1580 = vpow.pop %v1579
        %v1581 = vmul.f32 %v1570, 1.442695
        %v1582 = vpow.pop %v1581
        %v1583 = vmul.f32 %v1571, 1.442695
        %v1584 = vpow.pop %v1583
        %v1585 = vmul.f32 %v1572, 1.442695
        %v1586 = vpow.pop %v1585
        %v1587 = vmul.f32 %v1573, 1.442695
        %v1588 = vpow.pop %v1587
        %v1589 = vmul.f32 %v1574, 1.442695
        %v1590 = vpow.pop %v1589
        %v1591 = vld [vmem:[#allocation6] sm:$0xff]
        %v1592 = vld [vmem:[#allocation6 + $0x8] sm:$0xff]
        %v1593 = vld [vmem:[#allocation6 + $0x10] sm:$0xff]
        %v1594 = vld [vmem:[#allocation6 + $0x18] sm:$0xff]
        %v1595 = vld [vmem:[#allocation6 + $0x20] sm:$0xff]
        %v1596 = vld [vmem:[#allocation6 + $0x28] sm:$0xff]
        %v1597 = vld [vmem:[#allocation6 + $0x30] sm:$0xff]
        %v1598 = vld [vmem:[#allocation6 + $0x38] sm:$0xff]
        %v1599 = vmul.f32 %v1512, %v1591
        %v1600 = vmul.f32 %v1514, %v1592
        %v1601 = vmul.f32 %v1516, %v1593
        %v1602 = vmul.f32 %v1518, %v1594
        %v1603 = vmul.f32 %v1520, %v1595
        %v1604 = vmul.f32 %v1522, %v1596
        %v1605 = vmul.f32 %v1524, %v1597
        %v1606 = vmul.f32 %v1526, %v1598
        %v1607 = vsel %vm1470, %v1576, 0.0
        %1608 = vadd.xlane.f32.xlu0 %v1607
        %v1609 = vpop.xlane.xlu0 %1608
        %v1610 = vsel %vm1470, %v1578, 0.0
        %1611 = vadd.xlane.f32.xlu0 %v1610
        %v1612 = vpop.xlane.xlu0 %1611
        %v1613 = vsel %vm1470, %v1580, 0.0
        %1614 = vadd.xlane.f32.xlu0 %v1613
        %v1615 = vpop.xlane.xlu0 %1614
        %v1616 = vsel %vm1470, %v1582, 0.0
        %1617 = vadd.xlane.f32.xlu0 %v1616
        %v1618 = vpop.xlane.xlu0 %1617
        %v1619 = vsel %vm1470, %v1584, 0.0
        %1620 = vadd.xlane.f32.xlu0 %v1619
        %v1621 = vpop.xlane.xlu0 %1620
        %v1622 = vsel %vm1470, %v1586, 0.0
        %1623 = vadd.xlane.f32.xlu0 %v1622
        %v1624 = vpop.xlane.xlu0 %1623
        %v1625 = vsel %vm1470, %v1588, 0.0
        %1626 = vadd.xlane.f32.xlu0 %v1625
        %v1627 = vpop.xlane.xlu0 %1626
        %v1628 = vsel %vm1470, %v1590, 0.0
        %1629 = vadd.xlane.f32.xlu0 %v1628
        %v1630 = vpop.xlane.xlu0 %1629
        %v1631 = vadd.f32 %v1599, %v1609
        %v1632 = vadd.f32 %v1600, %v1612
        %v1633 = vadd.f32 %v1601, %v1615
        %v1634 = vadd.f32 %v1602, %v1618
        %v1635 = vadd.f32 %v1603, %v1621
        %v1636 = vadd.f32 %v1604, %v1624
        %v1637 = vadd.f32 %v1605, %v1627
        %v1638 = vadd.f32 %v1606, %v1630
        %1639 = vst.msk [vmem:[#allocation6] sm:$0xff] %vm431, %v1631
        %1640 = vst.msk [vmem:[#allocation6 + $0x8] sm:$0xff] %vm431, %v1632
        %1641 = vst.msk [vmem:[#allocation6 + $0x10] sm:$0xff] %vm431, %v1633
        %1642 = vst.msk [vmem:[#allocation6 + $0x18] sm:$0xff] %vm431, %v1634
        %1643 = vst.msk [vmem:[#allocation6 + $0x20] sm:$0xff] %vm431, %v1635
        %1644 = vst.msk [vmem:[#allocation6 + $0x28] sm:$0xff] %vm431, %v1636
        %1645 = vst.msk [vmem:[#allocation6 + $0x30] sm:$0xff] %vm431, %v1637
        %1646 = vst.msk [vmem:[#allocation6 + $0x38] sm:$0xff] %vm431, %v1638
        %v1647 = vld [vmem:[#allocation7] sm:$0xff]
        %v1648 = vld [vmem:[#allocation7 + $0x8] sm:$0xff]
        %v1649 = vld [vmem:[#allocation7 + $0x10] sm:$0xff]
        %v1650 = vld [vmem:[#allocation7 + $0x18] sm:$0xff]
        %v1651 = vld [vmem:[#allocation7 + $0x20] sm:$0xff]
        %v1652 = vld [vmem:[#allocation7 + $0x28] sm:$0xff]
        %v1653 = vld [vmem:[#allocation7 + $0x30] sm:$0xff]
        %v1654 = vld [vmem:[#allocation7 + $0x38] sm:$0xff]
        %1656 = vset.pattern.permute.xlu0 0
        %1657 = vperm.xlu0 %1656, %v1512
        %v1658 = vpop.permute.xlu0 %1657
        %1661 = vset.pattern.permute.xlu0 0
        %1662 = vperm.xlu0 %1661, %v1514
        %v1663 = vpop.permute.xlu0 %1662
        %1666 = vset.pattern.permute.xlu0 0
        %1667 = vperm.xlu0 %1666, %v1516
        %v1668 = vpop.permute.xlu0 %1667
        %1671 = vset.pattern.permute.xlu0 0
        %1672 = vperm.xlu0 %1671, %v1518
        %v1673 = vpop.permute.xlu0 %1672
        %1676 = vset.pattern.permute.xlu0 0
        %1677 = vperm.xlu0 %1676, %v1520
        %v1678 = vpop.permute.xlu0 %1677
        %1681 = vset.pattern.permute.xlu0 0
        %1682 = vperm.xlu0 %1681, %v1522
        %v1683 = vpop.permute.xlu0 %1682
        %1686 = vset.pattern.permute.xlu0 0
        %1687 = vperm.xlu0 %1686, %v1524
        %v1688 = vpop.permute.xlu0 %1687
        %1691 = vset.pattern.permute.xlu0 0
        %1692 = vperm.xlu0 %1691, %v1526
        %v1693 = vpop.permute.xlu0 %1692
        %v1695 = vmul.f32 %v1658, %v1647
        %v1696 = vmul.f32 %v1663, %v1648
        %v1697 = vmul.f32 %v1668, %v1649
        %v1698 = vmul.f32 %v1673, %v1650
        %v1699 = vmul.f32 %v1678, %v1651
        %v1700 = vmul.f32 %v1683, %v1652
        %v1701 = vmul.f32 %v1688, %v1653
        %v1702 = vmul.f32 %v1693, %v1654
        %v1703 = vpack.c.bf16 %v1578, %v1576
        %v1704 = vpack.c.bf16 %v1582, %v1580
        %v1705 = vpack.c.bf16 %v1586, %v1584
        %v1706 = vpack.c.bf16 %v1590, %v1588
        %v1709 = vunpack.c.l.b16 %v1206
        %v1710 = vunpack.c.l.b16 %v1207
        %v1711 = vpack.c.b16 %v1710, %v1709
        %v1714 = vsel %vm1470, %v1703, 0
        %1716 = vmatprep.subr.bf16.mxu0 0
        %1717 = vmatpush1.bf16.msra.mxu0 0
        %1718 = vmatprep.subr.bf16.mxu0 0
        %1719 = vmatpush1.bf16.msra.mxu0 0
        %1720 = vmatprep.subr.bf16.mxu0 0
        %1721 = vmatpush1.bf16.msra.mxu0 0
        %1722 = vmatprep.subr.bf16.mxu0 0
        %1723 = vmatpush1.bf16.msra.mxu0 0
        %1724 = vmatprep.subr.bf16.mxu0 0
        %1725 = vmatpush1.bf16.msra.mxu0 0
        %1726 = vmatprep.subr.bf16.mxu0 0
        %1727 = vmatpush1.bf16.msra.mxu0 0
        %1728 = vmatprep.subr.bf16.mxu0 0
        %1729 = vmatpush1.bf16.msra.mxu0 0
        %1730 = vmatprep.subr.bf16.mxu0 0
        %1731 = vmatpush1.bf16.msra.mxu0 %v1711
        %1732 = vmatprep.subr.bf16.mxu0 0
        %1733 = vmatpush2.bf16.msra.mxu0 0
        %1734 = vmatprep.subr.bf16.mxu0 0
        %1735 = vmatpush2.bf16.msra.mxu0 0
        %1736 = vmatprep.subr.bf16.mxu0 0
        %1737 = vmatpush2.bf16.msra.mxu0 0
        %1738 = vmatprep.subr.bf16.mxu0 0
        %1739 = vmatpush2.bf16.msra.mxu0 0
        %1740 = vmatprep.subr.bf16.mxu0 0
        %1741 = vmatpush2.bf16.msra.mxu0 0
        %1742 = vmatprep.subr.bf16.mxu0 0
        %1743 = vmatpush2.bf16.msra.mxu0 0
        %1744 = vmatprep.subr.bf16.mxu0 0
        %1745 = vmatpush2.bf16.msra.mxu0 0
        %1746 = vmatprep.subr.bf16.mxu0 0
        %1747 = vmatpush2.bf16.msra.mxu0 0
        %1748 = vmatprep.mubr.bf16.mxu0 0
        %1749 = vmatmul.mubr.bf16.gmra.mxu0 %v1714
        %v1750 = vpop.f32.mrf.mxu0
        %v1751 = vadd.f32 0.0, %v1750
        %v1752 = vpop.f32.mrf.mxu0
        %v1753 = vpop.f32.mrf.mxu0
        %v1754 = vadd.f32 0.0, %v1753
        %v1755 = vpop.f32.mrf.mxu0
        %1756 = vdwg.mxu0
        %v1759 = vunpack.c.l.b16 %v1208
        %v1760 = vunpack.c.l.b16 %v1209
        %v1761 = vpack.c.b16 %v1760, %v1759
        %v1764 = vsel %vm1470, %v1704, 0
        %1766 = vmatprep.subr.bf16.mxu0 0
        %1767 = vmatpush1.bf16.msra.mxu0 0
        %1768 = vmatprep.subr.bf16.mxu0 0
        %1769 = vmatpush1.bf16.msra.mxu0 0
        %1770 = vmatprep.subr.bf16.mxu0 0
        %1771 = vmatpush1.bf16.msra.mxu0 0
        %1772 = vmatprep.subr.bf16.mxu0 0
        %1773 = vmatpush1.bf16.msra.mxu0 0
        %1774 = vmatprep.subr.bf16.mxu0 0
        %1775 = vmatpush1.bf16.msra.mxu0 0
        %1776 = vmatprep.subr.bf16.mxu0 0
        %1777 = vmatpush1.bf16.msra.mxu0 0
        %1778 = vmatprep.subr.bf16.mxu0 0
        %1779 = vmatpush1.bf16.msra.mxu0 0
        %1780 = vmatprep.subr.bf16.mxu0 0
        %1781 = vmatpush1.bf16.msra.mxu0 %v1761
        %1782 = vmatprep.subr.bf16.mxu0 0
        %1783 = vmatpush2.bf16.msra.mxu0 0
        %1784 = vmatprep.subr.bf16.mxu0 0
        %1785 = vmatpush2.bf16.msra.mxu0 0
        %1786 = vmatprep.subr.bf16.mxu0 0
        %1787 = vmatpush2.bf16.msra.mxu0 0
        %1788 = vmatprep.subr.bf16.mxu0 0
        %1789 = vmatpush2.bf16.msra.mxu0 0
        %1790 = vmatprep.subr.bf16.mxu0 0
        %1791 = vmatpush2.bf16.msra.mxu0 0
        %1792 = vmatprep.subr.bf16.mxu0 0
        %1793 = vmatpush2.bf16.msra.mxu0 0
        %1794 = vmatprep.subr.bf16.mxu0 0
        %1795 = vmatpush2.bf16.msra.mxu0 0
        %1796 = vmatprep.subr.bf16.mxu0 0
        %1797 = vmatpush2.bf16.msra.mxu0 0
        %1798 = vmatprep.mubr.bf16.mxu0 0
        %1799 = vmatmul.mubr.bf16.gmra.mxu0 %v1764
        %v1800 = vpop.f32.mrf.mxu0
        %v1801 = vadd.f32 0.0, %v1800
        %v1802 = vpop.f32.mrf.mxu0
        %v1803 = vpop.f32.mrf.mxu0
        %v1804 = vadd.f32 0.0, %v1803
        %v1805 = vpop.f32.mrf.mxu0
        %1806 = vdwg.mxu0
        %v1809 = vunpack.c.l.b16 %v1210
        %v1810 = vunpack.c.l.b16 %v1211
        %v1811 = vpack.c.b16 %v1810, %v1809
        %v1814 = vsel %vm1470, %v1705, 0
        %1816 = vmatprep.subr.bf16.mxu0 0
        %1817 = vmatpush1.bf16.msra.mxu0 0
        %1818 = vmatprep.subr.bf16.mxu0 0
        %1819 = vmatpush1.bf16.msra.mxu0 0
        %1820 = vmatprep.subr.bf16.mxu0 0
        %1821 = vmatpush1.bf16.msra.mxu0 0
        %1822 = vmatprep.subr.bf16.mxu0 0
        %1823 = vmatpush1.bf16.msra.mxu0 0
        %1824 = vmatprep.subr.bf16.mxu0 0
        %1825 = vmatpush1.bf16.msra.mxu0 0
        %1826 = vmatprep.subr.bf16.mxu0 0
        %1827 = vmatpush1.bf16.msra.mxu0 0
        %1828 = vmatprep.subr.bf16.mxu0 0
        %1829 = vmatpush1.bf16.msra.mxu0 0
        %1830 = vmatprep.subr.bf16.mxu0 0
        %1831 = vmatpush1.bf16.msra.mxu0 %v1811
        %1832 = vmatprep.subr.bf16.mxu0 0
        %1833 = vmatpush2.bf16.msra.mxu0 0
        %1834 = vmatprep.subr.bf16.mxu0 0
        %1835 = vmatpush2.bf16.msra.mxu0 0
        %1836 = vmatprep.subr.bf16.mxu0 0
        %1837 = vmatpush2.bf16.msra.mxu0 0
        %1838 = vmatprep.subr.bf16.mxu0 0
        %1839 = vmatpush2.bf16.msra.mxu0 0
        %1840 = vmatprep.subr.bf16.mxu0 0
        %1841 = vmatpush2.bf16.msra.mxu0 0
        %1842 = vmatprep.subr.bf16.mxu0 0
        %1843 = vmatpush2.bf16.msra.mxu0 0
        %1844 = vmatprep.subr.bf16.mxu0 0
        %1845 = vmatpush2.bf16.msra.mxu0 0
        %1846 = vmatprep.subr.bf16.mxu0 0
        %1847 = vmatpush2.bf16.msra.mxu0 0
        %1848 = vmatprep.mubr.bf16.mxu0 0
        %1849 = vmatmul.mubr.bf16.gmra.mxu0 %v1814
        %v1850 = vpop.f32.mrf.mxu0
        %v1851 = vadd.f32 0.0, %v1850
        %v1852 = vpop.f32.mrf.mxu0
        %v1853 = vpop.f32.mrf.mxu0
        %v1854 = vadd.f32 0.0, %v1853
        %v1855 = vpop.f32.mrf.mxu0
        %1856 = vdwg.mxu0
        %v1859 = vunpack.c.l.b16 %v1212
        %v1860 = vunpack.c.l.b16 %v1213
        %v1861 = vpack.c.b16 %v1860, %v1859
        %v1864 = vsel %vm1470, %v1706, 0
        %1866 = vmatprep.subr.bf16.mxu0 0
        %1867 = vmatpush1.bf16.msra.mxu0 0
        %1868 = vmatprep.subr.bf16.mxu0 0
        %1869 = vmatpush1.bf16.msra.mxu0 0
        %1870 = vmatprep.subr.bf16.mxu0 0
        %1871 = vmatpush1.bf16.msra.mxu0 0
        %1872 = vmatprep.subr.bf16.mxu0 0
        %1873 = vmatpush1.bf16.msra.mxu0 0
        %1874 = vmatprep.subr.bf16.mxu0 0
        %1875 = vmatpush1.bf16.msra.mxu0 0
        %1876 = vmatprep.subr.bf16.mxu0 0
        %1877 = vmatpush1.bf16.msra.mxu0 0
        %1878 = vmatprep.subr.bf16.mxu0 0
        %1879 = vmatpush1.bf16.msra.mxu0 0
        %1880 = vmatprep.subr.bf16.mxu0 0
        %1881 = vmatpush1.bf16.msra.mxu0 %v1861
        %1882 = vmatprep.subr.bf16.mxu0 0
        %1883 = vmatpush2.bf16.msra.mxu0 0
        %1884 = vmatprep.subr.bf16.mxu0 0
        %1885 = vmatpush2.bf16.msra.mxu0 0
        %1886 = vmatprep.subr.bf16.mxu0 0
        %1887 = vmatpush2.bf16.msra.mxu0 0
        %1888 = vmatprep.subr.bf16.mxu0 0
        %1889 = vmatpush2.bf16.msra.mxu0 0
        %1890 = vmatprep.subr.bf16.mxu0 0
        %1891 = vmatpush2.bf16.msra.mxu0 0
        %1892 = vmatprep.subr.bf16.mxu0 0
        %1893 = vmatpush2.bf16.msra.mxu0 0
        %1894 = vmatprep.subr.bf16.mxu0 0
        %1895 = vmatpush2.bf16.msra.mxu0 0
        %1896 = vmatprep.subr.bf16.mxu0 0
        %1897 = vmatpush2.bf16.msra.mxu0 0
        %1898 = vmatprep.mubr.bf16.mxu0 0
        %1899 = vmatmul.mubr.bf16.gmra.mxu0 %v1864
        %v1900 = vpop.f32.mrf.mxu0
        %v1901 = vadd.f32 0.0, %v1900
        %v1902 = vpop.f32.mrf.mxu0
        %v1903 = vpop.f32.mrf.mxu0
        %v1904 = vadd.f32 0.0, %v1903
        %v1905 = vpop.f32.mrf.mxu0
        %1906 = vdwg.mxu0
        %v1907 = vadd.f32 %v1695, %v1751
        %v1908 = vadd.f32 %v1696, %v1754
        %v1909 = vadd.f32 %v1697, %v1801
        %v1910 = vadd.f32 %v1698, %v1804
        %v1911 = vadd.f32 %v1699, %v1851
        %v1912 = vadd.f32 %v1700, %v1854
        %v1913 = vadd.f32 %v1701, %v1901
        %v1914 = vadd.f32 %v1702, %v1904
        %1915 = vst.msk [vmem:[#allocation7] sm:$0xff] %vm448, %v1907
        %1916 = vst.msk [vmem:[#allocation7 + $0x8] sm:$0xff] %vm448, %v1908
        %1917 = vst.msk [vmem:[#allocation7 + $0x10] sm:$0xff] %vm448, %v1909
        %1918 = vst.msk [vmem:[#allocation7 + $0x18] sm:$0xff] %vm448, %v1910
        %1919 = vst.msk [vmem:[#allocation7 + $0x20] sm:$0xff] %vm448, %v1911
        %1920 = vst.msk [vmem:[#allocation7 + $0x28] sm:$0xff] %vm448, %v1912
        %1921 = vst.msk [vmem:[#allocation7 + $0x30] sm:$0xff] %vm448, %v1913
        %1922 = vst.msk [vmem:[#allocation7 + $0x38] sm:$0xff] %vm448, %v1914
        %1923 = vst.msk [vmem:[#allocation5] sm:$0xff] %vm431, %v1495
        %1924 = vst.msk [vmem:[#allocation5 + $0x8] sm:$0xff] %vm431, %v1496
        %1925 = vst.msk [vmem:[#allocation5 + $0x10] sm:$0xff] %vm431, %v1497
        %1926 = vst.msk [vmem:[#allocation5 + $0x18] sm:$0xff] %vm431, %v1498
        %1927 = vst.msk [vmem:[#allocation5 + $0x20] sm:$0xff] %vm431, %v1499
        %1928 = vst.msk [vmem:[#allocation5 + $0x28] sm:$0xff] %vm431, %v1500
        %1929 = vst.msk [vmem:[#allocation5 + $0x30] sm:$0xff] %vm431, %v1501
        %1930 = vst.msk [vmem:[#allocation5 + $0x38] sm:$0xff] %vm431, %v1502
        %v1931 = vld [vmem:[#allocation6] sm:$0xff]
        %v1932 = vld [vmem:[#allocation6 + $0x8] sm:$0xff]
        %v1933 = vld [vmem:[#allocation6 + $0x10] sm:$0xff]
        %v1934 = vld [vmem:[#allocation6 + $0x18] sm:$0xff]
        %v1935 = vld [vmem:[#allocation6 + $0x20] sm:$0xff]
        %v1936 = vld [vmem:[#allocation6 + $0x28] sm:$0xff]
        %v1937 = vld [vmem:[#allocation6 + $0x30] sm:$0xff]
        %v1938 = vld [vmem:[#allocation6 + $0x38] sm:$0xff]
        %v1939 = vrcp.pop %v1931
        %v1940 = vrcp.pop %v1932
        %v1941 = vrcp.pop %v1933
        %v1942 = vrcp.pop %v1934
        %v1943 = vrcp.pop %v1935
        %v1944 = vrcp.pop %v1936
        %v1945 = vrcp.pop %v1937
        %v1946 = vrcp.pop %v1938
        %v1947 = vld [vmem:[#allocation7] sm:$0xff]
        %v1948 = vld [vmem:[#allocation7 + $0x8] sm:$0xff]
        %1950 = vset.pattern.permute.xlu0 0
        %1951 = vperm.xlu0 %1950, %v1939
        %v1952 = vpop.permute.xlu0 %1951
        %1955 = vset.pattern.permute.xlu0 0
        %1956 = vperm.xlu0 %1955, %v1940
        %v1957 = vpop.permute.xlu0 %1956
        %v1959 = vmul.f32 %v1947, %v1952
        %v1960 = vmul.f32 %v1948, %v1957
        %v1961 = vpack.c.bf16 %v1960, %v1959
        %v1963 = vunpack.c.l.b16 %v1961
        %v1964 = vunpack.c.h.b16 %v1961
        %v1965 = vpack.c.b16 %v1963, %v1963
        %v1966 = vpack.c.b16 %v1964, %v1964
        %1969 = vst.msk [vmem:[#allocation8] sm:$0xf] %vm316, %v1965
        %1970 = vst.msk [vmem:[#allocation8 + $0x4] sm:$0xf] %vm316, %v1966
        %s1971 = scalar_lea.vmem [#allocation7], 16
        %v1972 = vld [vmem:[%s1971] sm:$0xff]
        %v1973 = vld [vmem:[%s1971 + $0x8] sm:$0xff]
        %1975 = vset.pattern.permute.xlu0 0
        %1976 = vperm.xlu0 %1975, %v1941
        %v1977 = vpop.permute.xlu0 %1976
        %1980 = vset.pattern.permute.xlu0 0
        %1981 = vperm.xlu0 %1980, %v1942
        %v1982 = vpop.permute.xlu0 %1981
        %v1984 = vmul.f32 %v1972, %v1977
        %v1985 = vmul.f32 %v1973, %v1982
        %v1986 = vpack.c.bf16 %v1985, %v1984
        %v1988 = vunpack.c.l.b16 %v1986
        %v1989 = vunpack.c.h.b16 %v1986
        %v1990 = vpack.c.b16 %v1988, %v1988
        %v1991 = vpack.c.b16 %v1989, %v1989
        %1992 = vrot.lane.b32.xlu0 %v1990, 8
        %v1993 = vpop.permute.xlu0 %1992
        %1994 = vrot.lane.b32.xlu0 %v1991, 8
        %v1995 = vpop.permute.xlu0 %1994
        %vm1998 = vcmask 126016
        %1999 = vst.msk [vmem:[#allocation8] sm:$0xf] %vm1998, %v1993
        %2000 = vst.msk [vmem:[#allocation8 + $0x4] sm:$0xf] %vm1998, %v1995
        %s2001 = scalar_lea.vmem [#allocation7], 32
        %v2002 = vld [vmem:[%s2001] sm:$0xff]
        %v2003 = vld [vmem:[%s2001 + $0x8] sm:$0xff]
        %2005 = vset.pattern.permute.xlu0 0
        %2006 = vperm.xlu0 %2005, %v1943
        %v2007 = vpop.permute.xlu0 %2006
        %2010 = vset.pattern.permute.xlu0 0
        %2011 = vperm.xlu0 %2010, %v1944
        %v2012 = vpop.permute.xlu0 %2011
        %v2014 = vmul.f32 %v2002, %v2007
        %v2015 = vmul.f32 %v2003, %v2012
        %v2016 = vpack.c.bf16 %v2015, %v2014
        %v2018 = vunpack.c.l.b16 %v2016
        %v2019 = vunpack.c.h.b16 %v2016
        %v2020 = vpack.c.b16 %v2018, %v2018
        %v2021 = vpack.c.b16 %v2019, %v2019
        %2022 = vrot.lane.b32.xlu0 %v2020, 16
        %v2023 = vpop.permute.xlu0 %2022
        %2024 = vrot.lane.b32.xlu0 %v2021, 16
        %v2025 = vpop.permute.xlu0 %2024
        %vm2028 = vcmask 191616
        %2029 = vst.msk [vmem:[#allocation8] sm:$0xf] %vm2028, %v2023
        %2030 = vst.msk [vmem:[#allocation8 + $0x4] sm:$0xf] %vm2028, %v2025
        %s2031 = scalar_lea.vmem [#allocation7], 48
        %v2032 = vld [vmem:[%s2031] sm:$0xff]
        %v2033 = vld [vmem:[%s2031 + $0x8] sm:$0xff]
        %2035 = vset.pattern.permute.xlu0 0
        %2036 = vperm.xlu0 %2035, %v1945
        %v2037 = vpop.permute.xlu0 %2036
        %2040 = vset.pattern.permute.xlu0 0
        %2041 = vperm.xlu0 %2040, %v1946
        %v2042 = vpop.permute.xlu0 %2041
        %v2044 = vmul.f32 %v2032, %v2037
        %v2045 = vmul.f32 %v2033, %v2042
        %v2046 = vpack.c.bf16 %v2045, %v2044
        %v2048 = vunpack.c.l.b16 %v2046
        %v2049 = vunpack.c.h.b16 %v2046
        %v2050 = vpack.c.b16 %v2048, %v2048
        %v2051 = vpack.c.b16 %v2049, %v2049
        %2052 = vrot.lane.b32.xlu0 %v2050, 24
        %v2053 = vpop.permute.xlu0 %2052
        %2054 = vrot.lane.b32.xlu0 %v2051, 24
        %v2055 = vpop.permute.xlu0 %2054
        %vm2058 = vcmask 257216
        %2059 = vst.msk [vmem:[#allocation8] sm:$0xf] %vm2058, %v2053
        %2060 = vst.msk [vmem:[#allocation8 + $0x4] sm:$0xf] %vm2058, %v2055
        %v2061 = vld [vmem:[#allocation8] sm:$0xf]
        %v2062 = vld [vmem:[#allocation8 + $0x4] sm:$0xf]
        %v2063 = vld [vmem:[#allocation14] sm:$0xf]
        %v2064 = vld [vmem:[#allocation14 + $0x4] sm:$0xf]
        %v2065 = vld [vmem:[#allocation14 + $0x8] sm:$0xf]
        %v2066 = vld [vmem:[#allocation14 + $0xc] sm:$0xf]
        %v2069 = vunpack.c.l.b16 %v2061
        %v2070 = vunpack.c.l.b16 %v2062
        %v2071 = vpack.c.b16 %v2070, %v2069
        %v2076 = vunpack.c.l.b16 %v2063
        %v2077 = vunpack.c.l.b16 %v2064
        %v2078 = vunpack.c.l.b16 %v2065
        %v2079 = vunpack.c.l.b16 %v2066
        %v2080 = vpack.c.b16 %v2077, %v2076
        %v2081 = vpack.c.b16 %v2079, %v2078
        %v2085 = vsel %vm263, %v2071, 0
        %2087 = vmatprep.subr.bf16.mxu0 0
        %2088 = vmatpush1.bf16.msra.mxu0 0
        %2089 = vmatprep.subr.bf16.mxu0 0
        %2090 = vmatpush1.bf16.msra.mxu0 0
        %2091 = vmatprep.subr.bf16.mxu0 0
        %2092 = vmatpush1.bf16.msra.mxu0 0
        %2093 = vmatprep.subr.bf16.mxu0 0
        %2094 = vmatpush1.bf16.msra.mxu0 0
        %2095 = vmatprep.subr.bf16.mxu0 0
        %2096 = vmatpush1.bf16.msra.mxu0 0
        %2097 = vmatprep.subr.bf16.mxu0 0
        %2098 = vmatpush1.bf16.msra.mxu0 0
        %2099 = vmatprep.subr.bf16.mxu0 0
        %2100 = vmatpush1.bf16.msra.mxu0 %v2081
        %2101 = vmatprep.subr.bf16.mxu0 0
        %2102 = vmatpush1.bf16.msra.mxu0 %v2080
        %2103 = vmatprep.subr.bf16.mxu0 0
        %2104 = vmatpush2.bf16.msra.mxu0 0
        %2105 = vmatprep.subr.bf16.mxu0 0
        %2106 = vmatpush2.bf16.msra.mxu0 0
        %2107 = vmatprep.subr.bf16.mxu0 0
        %2108 = vmatpush2.bf16.msra.mxu0 0
        %2109 = vmatprep.subr.bf16.mxu0 0
        %2110 = vmatpush2.bf16.msra.mxu0 0
        %2111 = vmatprep.subr.bf16.mxu0 0
        %2112 = vmatpush2.bf16.msra.mxu0 0
        %2113 = vmatprep.subr.bf16.mxu0 0
        %2114 = vmatpush2.bf16.msra.mxu0 0
        %2115 = vmatprep.subr.bf16.mxu0 0
        %2116 = vmatpush2.bf16.msra.mxu0 0
        %2117 = vmatprep.subr.bf16.mxu0 0
        %2118 = vmatpush2.bf16.msra.mxu0 0
        %2119 = vmatprep.mubr.bf16.mxu0 0
        %2120 = vmatmul.mubr.bf16.gmra.mxu0 %v2085
        %v2121 = vpop.f32.mrf.mxu0
        %v2122 = vadd.f32 0.0, %v2121
        %v2123 = vpop.f32.mrf.mxu0
        %v2124 = vpop.f32.mrf.mxu0
        %v2125 = vadd.f32 0.0, %v2124
        %v2126 = vpop.f32.mrf.mxu0
        %2127 = vdwg.mxu0
        %2128 = vst.msk [vmem:[%s235] sm:$0xff] %vm263, %v2122
        %2129 = vst.msk [vmem:[%s235 + $0x8] sm:$0xff] %vm263, %v2125
        %s2130 = sand.u32 %s113, 1
        %s2131 = scalar_lea.sflag [#allocation11], %s2130
        %s2132 = sand.u32 %s113, 1
        %s2133 = smul.addr %s2132, 16
        %s2134 = scalar_lea.vmem [#allocation15], %s2133
        // Predicated region
        $region52: #{tpu_custom_call.1} parent=31 // pred_check
          %p2135 = pneg %p123
        $region53: #{tpu_custom_call.1} parent=31 // pred_check_branch
          %2137 = sbr.rel (%p2135) target = $region55
        $region54: #{tpu_custom_call.1} parent=31 // pred_region
          %s2138 = smul.u32 2, %s26
          %s2140 = ssub.s32 256, 256
          %2141 = vsyncadd %s2131, %s2140
          %s2142 = smul.addr %s25, 2
          %s2143 = sadd.s32 %s2138, %s2142
          %s2144 = smul.addr %s2143, 128
          %s2145 = scalar_lea.hbm %s3, %s2144
          %s2146 = sshll.u32 %s2134, 4
          %s2147 = int_to_ptr.vmem [resolvable:$true] %s2146
          %2152 = dma.vmem_to_hbm [thread:$0]  %s2147, 256, %s2145, %s2131, 128, 128, 8
        $region55: #{tpu_custom_call.1} parent=31 // pred_fallthru
          _
      $region32: #{tpu_custom_call.1} parent=5 // pred_fallthru
        _
      %p2153 = scmp.le.s32.totalorder 2, %s16
      // Predicated region
      $region56: #{tpu_custom_call.1} parent=5 // pred_check
        %p2154 = pneg %p2153
      $region57: #{tpu_custom_call.1} parent=5 // pred_check_branch
        %2156 = sbr.rel (%p2154) target = $region59
      $region58: #{tpu_custom_call.1} parent=5 // pred_region
        %s2157 = ssub.s32 %s16, 2
        // Predicated region
        $region60: #{tpu_custom_call.1} parent=58 // pred_check
          %p2158 = pneg %p129
        $region61: #{tpu_custom_call.1} parent=58 // pred_check_branch
          %2160 = sbr.rel (%p2158) target = $region63
        $region62: #{tpu_custom_call.1} parent=58 // pred_region
          %s2161 = sand.u32 %s114, 1
          %s2162 = scalar_lea.sflag [#allocation11], %s2161
          %s2163 = sand.u32 %s114, 1
          %s2164 = smul.addr %s2163, 16
          %s2165 = scalar_lea.vmem [#allocation15], %s2164
          %2166 = dma.done %s2162, 256
        $region63: #{tpu_custom_call.1} parent=58 // pred_fallthru
          _
      $region59: #{tpu_custom_call.1} parent=5 // pred_fallthru
        _
    $region6: #{tpu_custom_call.1} parent=1 // loop_footer
      %s20 = sadd.s32 1, %s16
    $region7: #{tpu_custom_call.1} parent=1 // loop_footer_branch
      %15 = sbr.rel target = $region3
    $region8: #{tpu_custom_call.1} parent=1 // loop_exit
      _
    %2167 = vsyncpa [#allocation10], 1
    %s2168 = scalar_lea.sflag [#allocation10], 1
    %2169 = vsyncpa %s2168, 1
    %2170 = vsyncpa [#allocation13], 1
    %2171 = vsyncpa [#allocation11], 1
    %s2172 = scalar_lea.sflag [#allocation11], 1
    %2173 = vsyncpa %s2172, 1

</llo_original>
